<compile_context>
chip_gen: v7x
topology: tpu7x:2x2x1
jax: 0.10.0
libtpu: 0.0.40
codegen_flags: <defaults>
</compile_context>

<pallas_src>
from functools import partial

import numpy as np
import jax
import jax.numpy as jnp
from jax.experimental import pallas as pl
from jax.experimental.pallas import tpu as pltpu

LANE_EMBED = 16   # lane_embed_units
P_OUT = 4
D_OUT = 4
REL_EMBED = 4
CONV_CH = 20

# Shared row-offset tables for the packed parameter buffers.  Every block starts
# at a multiple-of-8 sublane so in-kernel slices are tile-aligned (no shuffles),
# and pack_params / the kernel cannot drift apart.
WA_PV, WA_DW, WA_DB, WA_LEWD, WA_ROWS = 0, 8, 16, 24, 32                 # wA: 16 lanes
WB_W40, WB_LCB, WB_HW, WB_HB, WB_BMW, WB_BMB, WB_ROWS = 0, 16, 24, 48, 56, 64, 72   # wB: 40 lanes

_VMEM = pl.BlockSpec(memory_space=pltpu.MemorySpace.VMEM)


# ---------------------------------------------------------------------------
# Fused FRAP forward kernel
# ---------------------------------------------------------------------------
def _make_fused_kernel(B, M, O, ds):
    BM = B * M
    R = B * O * (O - 1)          # rows of the 1x1-conv stack (= B*H*W in NCHW)
    G = B * O                    # output groups (one q-value each), g = b*O + o
    f32 = jnp.float32

    def kernel(xin_ref, t_ref, selw_ref, rel_ref, wa_ref, wb_ref, q_ref):
        # ---- packed-parameter unpack (sublane-aligned static slices) ------
        pv     = wa_ref[WA_PV:WA_PV + 2, :]                # (2,16) sigmoid(p_w)@le_w_p + le_b
        d_w    = wa_ref[WA_DW:WA_DW + ds, 0:D_OUT]         # (ds,4)
        d_b    = wa_ref[WA_DB:WA_DB + 1, 0:D_OUT]          # (1,4)
        le_w_d = wa_ref[WA_LEWD:WA_LEWD + D_OUT, :]        # (4,16)

        w40  = wb_ref[WB_W40:WB_W40 + LANE_EMBED, :]       # (16,40) = [lc_w[:16] | lc_w[16:]]
        lc_b = wb_ref[WB_LCB:WB_LCB + 1, 0:CONV_CH]        # (1,20)
        h_w  = wb_ref[WB_HW:WB_HW + CONV_CH, 0:CONV_CH]    # (20,20)
        h_b  = wb_ref[WB_HB:WB_HB + 1, 0:CONV_CH]          # (1,20)
        bm_w = wb_ref[WB_BMW:WB_BMW + 1, 0:CONV_CH]        # (1,20)
        bm_b = wb_ref[WB_BMB:WB_BMB + 1, 0:1]              # (1,1)

        xin = xin_ref[...]                                 # (BM, 1+ds)
        ext = xin[:, 0:1]                                  # (BM,1)  one-hot {0,1}
        dem = xin[:, 1:1 + ds]                             # (BM,ds) demand values

        # ---- per-movement lane embedding ----------------------------------
        # phase part: 2-row select of the pre-projected rows (exact, ext in {0,1})
        pe = jnp.where(ext > 0.5, pv[1:2, :], pv[0:1, :])  # (BM,16)
        if ds == 1:
            # demand path entirely on VPU/EUP: sigmoid + 4 broadcast FMAs
            de = jax.nn.sigmoid(dem * d_w + d_b)           # (BM,4)
            dc = de[:, 0:1] * le_w_d[0:1, :]
            for k in range(1, D_OUT):
                dc = dc + de[:, k:k + 1] * le_w_d[k:k + 1, :]   # (BM,16)
        else:
            de = jax.nn.sigmoid(jnp.dot(dem, d_w, preferred_element_type=f32) + d_b)
            dc = jnp.dot(de, le_w_d, preferred_element_type=f32)
        pd = jnp.maximum(pe + dc, 0.0)                     # (BM,16)

        # ---- pair gather + `.view` + lane_conv, two MXU pushes ------------
        # pdW = pd @ [Wa | Wb]  (one push), restack halves on sublanes in-vreg,
        # then lane = relu(T @ [pd@Wa ; pd@Wb] + b) with T the static 0/1 matrix
        # encoding the pair sums and the exact flat `.view(B,O,O-1,32)`.
        pdw = jnp.dot(pd, w40, preferred_element_type=f32)                  # (BM,40)
        uu = jnp.concatenate([pdw[:, 0:CONV_CH], pdw[:, CONV_CH:2 * CONV_CH]],
                             axis=0)                                        # (2BM,20)
        lane = jnp.maximum(
            jnp.dot(t_ref[...], uu, preferred_element_type=f32) + lc_b, 0.0)  # (R,20)

        # ---- relation path precomputed at pack time ------------------------
        comb = lane * rel_ref[...]                                          # (R,20)
        hidden = jnp.maximum(
            jnp.dot(comb, h_w, preferred_element_type=f32) + h_b, 0.0)      # (R,20)

        # ---- before_merge + group sum, lane-dense (1, G) output ------------
        # srow[r] = hidden[r].bm_w + bm_b ; q[g] = sum_{r in group g} srow[r]
        srow = jnp.sum(hidden * bm_w, axis=-1, keepdims=True) + bm_b        # (R,1)
        q = jnp.dot(jnp.ones((1, R), f32), srow * selw_ref[...],
                    preferred_element_type=f32)                             # (1,G)
        q_ref[...] = q

    return kernel


@partial(jax.jit, static_argnames=("oshape", "demand_shape"))
def frap_forward_pallas(states, consts, *, oshape, demand_shape):
    B = states.shape[0]
    ds = demand_shape
    M = (states.shape[1] - 1) // ds
    O = oshape
    BM, G = B * M, B * O

    acts = states[:, 0].astype(jnp.int32)
    rest = states[:, 1:].astype(jnp.float32)
    ext = consts['ext_table'][acts]                                  # (B,M) one gather
    if ds == 1:
        dem = rest[:, :M]                                            # columns == slices i:i+1
        xin = jnp.stack([ext, dem], axis=-1).reshape(BM, 2)
    else:
        # literal reproduction of the reference slicing states[:, i:i+demand_shape]
        dem = jnp.stack([rest[:, i:i + ds] for i in range(M)], axis=1)   # (B,M,ds)
        xin = jnp.concatenate([ext[..., None], dem], axis=-1).reshape(BM, 1 + ds)

    kernel = _make_fused_kernel(B, M, O, ds)
    q = pl.pallas_call(
        kernel,
        out_shape=jax.ShapeDtypeStruct((1, G), jnp.float32),
        in_specs=[_VMEM] * 6,
        out_specs=_VMEM,
    )(xin, consts['t'], consts['selw'], consts['rel'], consts['wA'], consts['wB'])

    # TODO(synk): DiscreteActionValueHead wraps q_values in a pfrl DiscreteActionValue
    # distribution object; no Pallas equivalent — return raw q-values.
    return q.reshape(B, O)


# ---------------------------------------------------------------------------
# One-time host-side constant / parameter packing
# ---------------------------------------------------------------------------
def build_gather_matrix(phase_pairs, B, M, lane_embed=LANE_EMBED):
    """Static 0/1 matrix T (R, 2*B*M) encoding pair-sum gather + the exact flat
    `.view(B, O, O-1, 2*lane_embed)` memory reinterpretation (batch-entangled)."""
    O = phase_pairs.shape[0]
    ph = [(i, j) for i in range(O) for j in range(O) if i != j]
    N = len(ph)
    R = B * N
    OB = O * B
    GP = np.zeros((OB, B * M), np.float32)       # pairs row o*B+b = pd[b,pp0]+pd[b,pp1]
    for o in range(O):
        for b in range(B):
            GP[o * B + b, b * M + phase_pairs[o, 0]] += 1.0
            GP[o * B + b, b * M + phase_pairs[o, 1]] += 1.0
    S0 = np.zeros((R, OB), np.float32)           # which pairs row feeds feat[r, 0:16]
    S1 = np.zeros((R, OB), np.float32)           # which pairs row feeds feat[r, 16:32]
    blk = lane_embed
    for r in range(R):
        for half, S in ((0, S0), (1, S1)):
            flat = r * 2 * blk + half * blk
            n = flat // (2 * B * blk)
            rem = flat % (2 * B * blk)
            p = rem // (B * blk)
            b = (rem % (B * blk)) // blk
            S[r, ph[n][p] * B + b] = 1.0
    return np.concatenate([S0 @ GP, S1 @ GP], axis=1)       # (R, 2*B*M)


def build_group_select(B, O):
    """selw (R, G): selw[r, r // (O-1)] = 1 — transposed group-sum selection."""
    R, G = B * O * (O - 1), B * O
    sel = np.zeros((R, G), np.float32)
    sel[np.arange(R), np.arange(R) // (O - 1)] = 1.0
    return sel


def build_ext_table(phase_pairs, M):
    """ext_table (O, M): one-hot of the two movements active in each phase."""
    O = phase_pairs.shape[0]
    tbl = np.zeros((O, M), np.float32)
    for a in range(O):
        tbl[a, phase_pairs[a, 0]] = 1.0
        tbl[a, phase_pairs[a, 1]] = 1.0
    return tbl


def pack_params(params, comp_mask, B, demand_shape):
    """Pack parameters into two sublane-aligned VMEM buffers + a precomputed
    relation map.  Parameter-only subexpressions are folded here (exact because
    the phase one-hot and the competition mask are strictly {0,1})."""
    f32 = jnp.float32
    ds = demand_shape
    assert ds <= WA_DB - WA_DW, "demand_shape too large for packed layout"
    O, Om1 = comp_mask.shape

    # pv = sigmoid(p_w) @ le_w_phase + le_b  (phase rows, pre-projected)
    pv = jax.nn.sigmoid(params['p_w']) @ params['le_w'][:P_OUT] + params['le_b']   # (2,16)
    wA = jnp.zeros((WA_ROWS, LANE_EMBED), f32)
    wA = wA.at[WA_PV:WA_PV + 2, :].set(pv)
    wA = wA.at[WA_DW:WA_DW + ds, 0:D_OUT].set(params['d_w'])
    wA = wA.at[WA_DB:WA_DB + 1, 0:D_OUT].set(params['d_b'])
    wA = wA.at[WA_LEWD:WA_LEWD + D_OUT, :].set(params['le_w'][P_OUT:])

    # W40 = [lc_w[:16] | lc_w[16:]] so the two lane_conv halves come out of one matmul
    w40 = jnp.concatenate([params['lc_w'][:LANE_EMBED], params['lc_w'][LANE_EMBED:]], axis=1)
    wB = jnp.zeros((WB_ROWS, 2 * CONV_CH), f32)
    wB = wB.at[WB_W40:WB_W40 + LANE_EMBED, :].set(w40)
    wB = wB.at[WB_LCB:WB_LCB + 1, 0:CONV_CH].set(params['lc_b'])
    wB = wB.at[WB_HW:WB_HW + CONV_CH, 0:CONV_CH].set(params['h_w'])
    wB = wB.at[WB_HB:WB_HB + 1, 0:CONV_CH].set(params['h_b'])
    wB = wB.at[WB_BMW:WB_BMW + 1, 0:CONV_CH].set(params['bm_w'].T)
    wB = wB.at[WB_BMB:WB_BMB + 1, 0:1].set(params['bm_b'])

    # full relation map: relu(relu(r_emb[cm]) @ rc_w + rc_b), tiled over batch
    rel_rows = jnp.maximum(
        jnp.maximum(params['r_emb'], 0.0) @ params['rc_w'] + params['rc_b'], 0.0)   # (2,20)
    cm = np.tile(np.asarray(comp_mask, np.int32).reshape(1, O, Om1), (B, 1, 1)).reshape(-1)
    rel = rel_rows[cm]                                                              # (R,20)
    return dict(wA=wA, wB=wB, rel=rel)


# ---------------------------------------------------------------------------
# Pure-JAX reference (literal translation of the PyTorch forward)
# ---------------------------------------------------------------------------
def frap_forward_ref(states, params, phase_pairs, comp_mask, oshape, demand_shape):
    B = states.shape[0]
    ds = demand_shape
    M = (states.shape[1] - 1) // ds
    O = oshape
    acts = states[:, 0].astype(jnp.int32)
    rest = states[:, 1:].astype(jnp.float32)
    pp = jnp.asarray(phase_pairs, jnp.int32)
    act_pairs = pp[acts]
    ext = jnp.zeros((B, M), jnp.int32).at[jnp.arange(B)[:, None], act_pairs].set(1)
    phase_embeds = jax.nn.sigmoid(params['p_w'][ext])                    # (B,M,4)
    pds = []
    for i in range(M):
        demand = rest[:, i:i + ds]
        demand = jax.nn.sigmoid(demand @ params['d_w'] + params['d_b'])
        phase_demand = jnp.concatenate([phase_embeds[:, i], demand], axis=-1)
        pds.append(jnp.maximum(phase_demand @ params['le_w'] + params['le_b'], 0.0))
    phase_demands = jnp.stack(pds, axis=1)                               # (B,M,16)
    pairs = jnp.transpose(
        phase_demands[:, pp[:, 0]] + phase_demands[:, pp[:, 1]], (1, 0, 2))  # (O,B,16)
    phases = np.stack(np.meshgrid(np.arange(O), np.arange(O), indexing='ij'),
                      axis=-1).reshape(O * O, 2)
    mask = np.ones(O * O, dtype=bool)
    mask[np.arange(0, O * O, O + 1)] = False
    phases = phases[mask]
    pair_perm = pairs[phases]                                            # (N,2,B,16)
    # Exact reproduction of the reference `.view(B, O, O-1, 32)` reinterpretation.
    rotated = pair_perm.reshape(B, O, O - 1, 2 * LANE_EMBED)
    feat = rotated.reshape(B * O * (O - 1), 2 * LANE_EMBED)
    lane = jnp.maximum(feat @ params['lc_w'] + params['lc_b'], 0.0)
    cm = jnp.tile(jnp.asarray(comp_mask, jnp.int32).reshape(1, O, O - 1),
                  (B, 1, 1)).reshape(-1)
    rel = jnp.maximum(params['r_emb'][cm], 0.0)
    rel = jnp.maximum(rel @ params['rc_w'] + params['rc_b'], 0.0)
    comb = lane * rel
    comb = jnp.maximum(comb @ params['h_w'] + params['h_b'], 0.0)
    comb = comb @ params['bm_w'] + params['bm_b']
    return comb.reshape(B, O, O - 1).sum(-1)


# ---------------------------------------------------------------------------
# Deterministic parameter / problem construction
# ---------------------------------------------------------------------------
def init_params(key, demand_shape):
    ks = jax.random.split(key, 14)

    def rn(k, shape, scale=0.1):
        return scale * jax.random.normal(k, shape, dtype=jnp.float32)

    return dict(
        p_w=rn(ks[0], (2, P_OUT)),                          # nn.Embedding(2, 4)
        d_w=rn(ks[1], (demand_shape, D_OUT)),               # nn.Linear(ds, 4)
        d_b=rn(ks[2], (1, D_OUT)),
        le_w=rn(ks[3], (P_OUT + D_OUT, LANE_EMBED)),        # nn.Linear(8, 16)
        le_b=rn(ks[4], (1, LANE_EMBED)),
        r_emb=rn(ks[5], (2, REL_EMBED)),                    # nn.Embedding(2, 4)
        lc_w=rn(ks[6], (2 * LANE_EMBED, CONV_CH)),          # Conv2d(32, 20, 1)
        lc_b=rn(ks[7], (1, CONV_CH)),
        rc_w=rn(ks[8], (REL_EMBED, CONV_CH)),               # Conv2d(4, 20, 1)
        rc_b=rn(ks[9], (1, CONV_CH)),
        h_w=rn(ks[10], (CONV_CH, CONV_CH)),                 # Conv2d(20, 20, 1)
        h_b=rn(ks[11], (1, CONV_CH)),
        bm_w=rn(ks[12], (CONV_CH, 1)),                      # Conv2d(20, 1, 1)
        bm_b=rn(ks[13], (1, 1)),
    )


def build_phase_structs():
    # 8 phases over 12 movements (typical FRAP intersection), deterministic.
    phase_pairs = np.array(
        [[0, 6], [1, 7], [2, 8], [3, 9], [4, 10], [5, 11], [0, 3], [6, 9]],
        dtype=np.int32)
    O = phase_pairs.shape[0]
    comp = np.zeros((O, O - 1), dtype=np.int32)
    for i in range(O):
        cnt = 0
        for j in range(O):
            if i == j:
                continue
            shared = len(set(phase_pairs[i].tolist() + phase_pairs[j].tolist()))
            comp[i, cnt] = 1 if shared == 3 else 0
            cnt += 1
    return phase_pairs, comp


if __name__ == "__main__":
    B = 4
    demand_shape = 1
    phase_pairs, comp_mask = build_phase_structs()
    O = int(phase_pairs.shape[0])            # output_shape = 8
    M = 12                                   # num_movements

    key = jax.random.PRNGKey(0)
    k_par, k_act, k_obs = jax.random.split(key, 3)
    params = init_params(k_par, demand_shape)

    acts = jax.random.randint(k_act, (B,), 0, O)
    obs = jax.random.uniform(k_obs, (B, M * demand_shape), minval=0.0, maxval=5.0,
                             dtype=jnp.float32)
    states = jnp.concatenate([acts.astype(jnp.float32)[:, None], obs], axis=1)

    # one-time host-side packing of parameters and static index structures
    consts = pack_params(params, comp_mask, B, demand_shape)
    consts['t'] = jnp.asarray(build_gather_matrix(phase_pairs, B, M), jnp.float32)
    consts['selw'] = jnp.asarray(build_group_select(B, O), jnp.float32)
    consts['ext_table'] = jnp.asarray(build_ext_table(phase_pairs, M), jnp.float32)

    q = frap_forward_pallas(states, consts, oshape=O, demand_shape=demand_shape)
    q = jax.block_until_ready(q)

    q_ref = frap_forward_ref(states, params, phase_pairs, comp_mask, O, demand_shape)
    np.testing.assert_allclose(np.asarray(q), np.asarray(q_ref), rtol=2e-3, atol=2e-3)
    assert q.shape == (B, O)
    print("KERNEL_OK")
</pallas_src>

<mosaic_0001>
module attributes {stable_mosaic.version = 11 : i64} {
  func.func @kernel(%arg0: memref<48x2xf32, #tpu.memory_space<vmem>>, %arg1: memref<224x96xf32, #tpu.memory_space<vmem>>, %arg2: memref<224x32xf32, #tpu.memory_space<vmem>>, %arg3: memref<224x20xf32, #tpu.memory_space<vmem>>, %arg4: memref<32x16xf32, #tpu.memory_space<vmem>>, %arg5: memref<72x40xf32, #tpu.memory_space<vmem>>, %arg6: memref<1x32xf32, #tpu.memory_space<vmem>>) attributes {dimension_semantics = [], scalar_prefetch = 0 : i64, scratch_operands = 0 : i64, tpu.core_type = #tpu.core_type<tc>} {
    %c0 = arith.constant 0 : index
    %c0_0 = arith.constant 0 : index
    %0 = vector.load %arg4[%c0, %c0_0] : memref<32x16xf32, #tpu.memory_space<vmem>>, vector<2x16xf32>
    %c8 = arith.constant 8 : index
    %c0_1 = arith.constant 0 : index
    %1 = vector.load %arg4[%c8, %c0_1] : memref<32x16xf32, #tpu.memory_space<vmem>>, vector<1x4xf32>
    %c16 = arith.constant 16 : index
    %c0_2 = arith.constant 0 : index
    %2 = vector.load %arg4[%c16, %c0_2] : memref<32x16xf32, #tpu.memory_space<vmem>>, vector<1x4xf32>
    %c24 = arith.constant 24 : index
    %c0_3 = arith.constant 0 : index
    %3 = vector.load %arg4[%c24, %c0_3] : memref<32x16xf32, #tpu.memory_space<vmem>>, vector<4x16xf32>
    %c0_4 = arith.constant 0 : index
    %c0_5 = arith.constant 0 : index
    %4 = vector.load %arg5[%c0_4, %c0_5] : memref<72x40xf32, #tpu.memory_space<vmem>>, vector<16x40xf32>
    %c16_6 = arith.constant 16 : index
    %c0_7 = arith.constant 0 : index
    %5 = vector.load %arg5[%c16_6, %c0_7] : memref<72x40xf32, #tpu.memory_space<vmem>>, vector<1x20xf32>
    %c24_8 = arith.constant 24 : index
    %c0_9 = arith.constant 0 : index
    %6 = vector.load %arg5[%c24_8, %c0_9] : memref<72x40xf32, #tpu.memory_space<vmem>>, vector<20x20xf32>
    %c48 = arith.constant 48 : index
    %c0_10 = arith.constant 0 : index
    %7 = vector.load %arg5[%c48, %c0_10] : memref<72x40xf32, #tpu.memory_space<vmem>>, vector<1x20xf32>
    %c56 = arith.constant 56 : index
    %c0_11 = arith.constant 0 : index
    %8 = vector.load %arg5[%c56, %c0_11] : memref<72x40xf32, #tpu.memory_space<vmem>>, vector<1x20xf32>
    %c64 = arith.constant 64 : index
    %c0_12 = arith.constant 0 : index
    %9 = vector.load %arg5[%c64, %c0_12] : memref<72x40xf32, #tpu.memory_space<vmem>>, vector<1x1xf32>
    %c0_13 = arith.constant 0 : index
    %c0_14 = arith.constant 0 : index
    %10 = vector.load %arg0[%c0_13, %c0_14] : memref<48x2xf32, #tpu.memory_space<vmem>>, vector<48x2xf32>
    %11 = vector.extract_strided_slice %10 {offsets = [0, 0], sizes = [48, 1], strides = [1, 1]} : vector<48x2xf32> to vector<48x1xf32>
    %12 = vector.extract_strided_slice %10 {offsets = [0, 1], sizes = [48, 1], strides = [1, 1]} : vector<48x2xf32> to vector<48x1xf32>
    %cst = arith.constant 5.000000e-01 : f32
    %13 = vector.broadcast %cst : f32 to vector<48x1xf32>
    %14 = arith.cmpf ogt, %11, %13 : vector<48x1xf32>
    %15 = vector.extract_strided_slice %0 {offsets = [1, 0], sizes = [1, 16], strides = [1, 1]} : vector<2x16xf32> to vector<1x16xf32>
    %16 = vector.extract_strided_slice %0 {offsets = [0, 0], sizes = [1, 16], strides = [1, 1]} : vector<2x16xf32> to vector<1x16xf32>
    %17 = vector.shape_cast %14 : vector<48x1xi1> to vector<48x1xi1>
    %18 = vector.broadcast %17 : vector<48x1xi1> to vector<48x16xi1>
    %19 = vector.shape_cast %15 : vector<1x16xf32> to vector<1x16xf32>
    %20 = vector.broadcast %19 : vector<1x16xf32> to vector<48x16xf32>
    %21 = vector.shape_cast %16 : vector<1x16xf32> to vector<1x16xf32>
    %22 = vector.broadcast %21 : vector<1x16xf32> to vector<48x16xf32>
    %23 = arith.select %18, %20, %22 : vector<48x16xi1>, vector<48x16xf32>
    %24 = vector.broadcast %12 : vector<48x1xf32> to vector<48x4xf32>
    %25 = vector.broadcast %1 : vector<1x4xf32> to vector<48x4xf32>
    %26 = arith.mulf %24, %25 : vector<48x4xf32>
    %27 = vector.broadcast %2 : vector<1x4xf32> to vector<48x4xf32>
    %28 = arith.addf %26, %27 : vector<48x4xf32>
    %29 = arith.negf %28 : vector<48x4xf32>
    %30 = math.exp %29 : vector<48x4xf32>
    %cst_15 = arith.constant 1.000000e+00 : f32
    %31 = vector.broadcast %cst_15 : f32 to vector<48x4xf32>
    %32 = arith.addf %31, %30 : vector<48x4xf32>
    %33 = arith.divf %31, %32 : vector<48x4xf32>
    %34 = vector.extract_strided_slice %33 {offsets = [0, 0], sizes = [48, 1], strides = [1, 1]} : vector<48x4xf32> to vector<48x1xf32>
    %35 = vector.extract_strided_slice %3 {offsets = [0, 0], sizes = [1, 16], strides = [1, 1]} : vector<4x16xf32> to vector<1x16xf32>
    %36 = vector.broadcast %34 : vector<48x1xf32> to vector<48x16xf32>
    %37 = vector.broadcast %35 : vector<1x16xf32> to vector<48x16xf32>
    %38 = arith.mulf %36, %37 : vector<48x16xf32>
    %39 = vector.extract_strided_slice %33 {offsets = [0, 1], sizes = [48, 1], strides = [1, 1]} : vector<48x4xf32> to vector<48x1xf32>
    %40 = vector.extract_strided_slice %3 {offsets = [1, 0], sizes = [1, 16], strides = [1, 1]} : vector<4x16xf32> to vector<1x16xf32>
    %41 = vector.broadcast %39 : vector<48x1xf32> to vector<48x16xf32>
    %42 = vector.broadcast %40 : vector<1x16xf32> to vector<48x16xf32>
    %43 = arith.mulf %41, %42 : vector<48x16xf32>
    %44 = arith.addf %38, %43 : vector<48x16xf32>
    %45 = vector.extract_strided_slice %33 {offsets = [0, 2], sizes = [48, 1], strides = [1, 1]} : vector<48x4xf32> to vector<48x1xf32>
    %46 = vector.extract_strided_slice %3 {offsets = [2, 0], sizes = [1, 16], strides = [1, 1]} : vector<4x16xf32> to vector<1x16xf32>
    %47 = vector.broadcast %45 : vector<48x1xf32> to vector<48x16xf32>
    %48 = vector.broadcast %46 : vector<1x16xf32> to vector<48x16xf32>
    %49 = arith.mulf %47, %48 : vector<48x16xf32>
    %50 = arith.addf %44, %49 : vector<48x16xf32>
    %51 = vector.extract_strided_slice %33 {offsets = [0, 3], sizes = [48, 1], strides = [1, 1]} : vector<48x4xf32> to vector<48x1xf32>
    %52 = vector.extract_strided_slice %3 {offsets = [3, 0], sizes = [1, 16], strides = [1, 1]} : vector<4x16xf32> to vector<1x16xf32>
    %53 = vector.broadcast %51 : vector<48x1xf32> to vector<48x16xf32>
    %54 = vector.broadcast %52 : vector<1x16xf32> to vector<48x16xf32>
    %55 = arith.mulf %53, %54 : vector<48x16xf32>
    %56 = arith.addf %50, %55 : vector<48x16xf32>
    %57 = arith.addf %23, %56 : vector<48x16xf32>
    %cst_16 = arith.constant 0.000000e+00 : f32
    %58 = vector.broadcast %cst_16 : f32 to vector<48x16xf32>
    %59 = arith.maximumf %57, %58 : vector<48x16xf32>
    %cst_17 = arith.constant dense<0.000000e+00> : vector<48x40xf32>
    %60 = tpu.matmul %59, %4, %cst_17 {dimension_numbers = #tpu.dot_dimension_numbers<[1], [0], [0], [1], [0, 0, 1, 1], [], []>} : vector<48x16xf32>, vector<16x40xf32>, vector<48x40xf32> -> vector<48x40xf32>
    %61 = vector.extract_strided_slice %60 {offsets = [0, 0], sizes = [48, 20], strides = [1, 1]} : vector<48x40xf32> to vector<48x20xf32>
    %62 = vector.extract_strided_slice %60 {offsets = [0, 20], sizes = [48, 20], strides = [1, 1]} : vector<48x40xf32> to vector<48x20xf32>
    %63 = tpu.concatenate %61, %62 in 0 : vector<48x20xf32>, vector<48x20xf32> -> vector<96x20xf32>
    %c0_18 = arith.constant 0 : index
    %c0_19 = arith.constant 0 : index
    %64 = vector.load %arg1[%c0_18, %c0_19] : memref<224x96xf32, #tpu.memory_space<vmem>>, vector<224x96xf32>
    %cst_20 = arith.constant dense<0.000000e+00> : vector<224x20xf32>
    %65 = tpu.matmul %64, %63, %cst_20 {dimension_numbers = #tpu.dot_dimension_numbers<[1], [0], [0], [1], [0, 0, 1, 1], [], []>} : vector<224x96xf32>, vector<96x20xf32>, vector<224x20xf32> -> vector<224x20xf32>
    %66 = vector.broadcast %5 : vector<1x20xf32> to vector<224x20xf32>
    %67 = arith.addf %65, %66 : vector<224x20xf32>
    %cst_21 = arith.constant 0.000000e+00 : f32
    %68 = vector.broadcast %cst_21 : f32 to vector<224x20xf32>
    %69 = arith.maximumf %67, %68 : vector<224x20xf32>
    %c0_22 = arith.constant 0 : index
    %c0_23 = arith.constant 0 : index
    %70 = vector.load %arg3[%c0_22, %c0_23] : memref<224x20xf32, #tpu.memory_space<vmem>>, vector<224x20xf32>
    %71 = arith.mulf %69, %70 : vector<224x20xf32>
    %cst_24 = arith.constant dense<0.000000e+00> : vector<224x20xf32>
    %72 = tpu.matmul %71, %6, %cst_24 {dimension_numbers = #tpu.dot_dimension_numbers<[1], [0], [0], [1], [0, 0, 1, 1], [], []>} : vector<224x20xf32>, vector<20x20xf32>, vector<224x20xf32> -> vector<224x20xf32>
    %73 = vector.broadcast %7 : vector<1x20xf32> to vector<224x20xf32>
    %74 = arith.addf %72, %73 : vector<224x20xf32>
    %cst_25 = arith.constant 0.000000e+00 : f32
    %75 = vector.broadcast %cst_25 : f32 to vector<224x20xf32>
    %76 = arith.maximumf %74, %75 : vector<224x20xf32>
    %77 = vector.broadcast %8 : vector<1x20xf32> to vector<224x20xf32>
    %78 = arith.mulf %76, %77 : vector<224x20xf32>
    %cst_26 = arith.constant dense<0.000000e+00> : vector<224xf32>
    %79 = vector.multi_reduction <add>, %78, %cst_26 [1] : vector<224x20xf32> to vector<224xf32>
    %80 = vector.shape_cast %79 : vector<224xf32> to vector<224x1xf32>
    %81 = vector.broadcast %9 : vector<1x1xf32> to vector<224x1xf32>
    %82 = arith.addf %80, %81 : vector<224x1xf32>
    %cst_27 = arith.constant 1.000000e+00 : f32
    %83 = vector.broadcast %cst_27 : f32 to vector<1x224xf32>
    %c0_28 = arith.constant 0 : index
    %c0_29 = arith.constant 0 : index
    %84 = vector.load %arg2[%c0_28, %c0_29] : memref<224x32xf32, #tpu.memory_space<vmem>>, vector<224x32xf32>
    %85 = vector.broadcast %82 : vector<224x1xf32> to vector<224x32xf32>
    %86 = arith.mulf %85, %84 : vector<224x32xf32>
    %cst_30 = arith.constant dense<0.000000e+00> : vector<1x32xf32>
    %87 = tpu.matmul %83, %86, %cst_30 {dimension_numbers = #tpu.dot_dimension_numbers<[1], [0], [0], [1], [0, 0, 1, 1], [], []>} : vector<1x224xf32>, vector<224x32xf32>, vector<1x32xf32> -> vector<1x32xf32>
    %c0_31 = arith.constant 0 : index
    %c0_32 = arith.constant 0 : index
    %88 = vector.load %arg6[%c0_31, %c0_32] : memref<1x32xf32, #tpu.memory_space<vmem>>, vector<1x32xf32>
    tpu.vector_store %arg6[%c0_31, %c0_32], %87 {strides = array<i32>} : memref<1x32xf32, #tpu.memory_space<vmem>>, vector<1x32xf32>,
    return
  }
}

</mosaic_0001>

<llo_original>
// kernel: frap_forward_pallas.1
$region0: #{frap_forward_pallas.1}
  #allocation0 [shape = 'u32[]', space=smem, size = 0x4, offset = 0x4, fixed_abs, tag = 'smem constant byte address 0x4 - core index']
  #allocation1 [shape = 'u32[144,128]{1,0:T(1,128)}', space=vmem, size = 0x12000, scoped, tag = 'internal scratch']
  %s0 = inlined_call_operand.vmem [shape: f32[48,2], index: 0, kind: input, shape index: {}]
  %s1 = inlined_call_operand.vmem [shape: f32[224,96], index: 1, kind: input, shape index: {}]
  %s2 = inlined_call_operand.vmem [shape: f32[224,32], index: 2, kind: input, shape index: {}]
  %s3 = inlined_call_operand.vmem [shape: f32[224,20], index: 3, kind: input, shape index: {}]
  %s4 = inlined_call_operand.vmem [shape: f32[32,16], index: 4, kind: input, shape index: {}]
  %s5 = inlined_call_operand.vmem [shape: f32[72,40], index: 5, kind: input, shape index: {}]
  %s6 = inlined_call_operand.vmem [shape: f32[1,32], index: 6, kind: output, shape index: {}]
  %s7 = sld [smem:[#allocation0]]
  $region34: #{frap_forward_pallas.1} parent=0
    _
  %s9 = ssub.s32 1, %s7
  %s10 = scalar_select 0, %s9, %s7
  // Predicated region
  $region2: #{frap_forward_pallas.1} parent=0 // pred_check
    _
  $region3: #{frap_forward_pallas.1} parent=0 // pred_check_branch
    %12 = sbr.rel (0) target = $region5
  $region4: #{frap_forward_pallas.1} parent=0 // pred_region
    _
  $region5: #{frap_forward_pallas.1} parent=0 // pred_fallthru
    _
  // Predicated region
  $region6: #{frap_forward_pallas.1} parent=0 // pred_check
    _
  $region7: #{frap_forward_pallas.1} parent=0 // pred_check_branch
    %14 = sbr.rel (0) target = $region9
  $region8: #{frap_forward_pallas.1} parent=0 // pred_region
    _
  $region9: #{frap_forward_pallas.1} parent=0 // pred_fallthru
    _
  // Predicated region
  $region10: #{frap_forward_pallas.1} parent=0 // pred_check
    _
  $region11: #{frap_forward_pallas.1} parent=0 // pred_check_branch
    %16 = sbr.rel (0) target = $region13
  $region12: #{frap_forward_pallas.1} parent=0 // pred_region
    _
  $region13: #{frap_forward_pallas.1} parent=0 // pred_fallthru
    _
  // Predicated region
  $region14: #{frap_forward_pallas.1} parent=0 // pred_check
    _
  $region15: #{frap_forward_pallas.1} parent=0 // pred_check_branch
    %18 = sbr.rel (0) target = $region17
  $region16: #{frap_forward_pallas.1} parent=0 // pred_region
    _
  $region17: #{frap_forward_pallas.1} parent=0 // pred_fallthru
    _
  // Predicated region
  $region18: #{frap_forward_pallas.1} parent=0 // pred_check
    _
  $region19: #{frap_forward_pallas.1} parent=0 // pred_check_branch
    %20 = sbr.rel (0) target = $region21
  $region20: #{frap_forward_pallas.1} parent=0 // pred_region
    _
  $region21: #{frap_forward_pallas.1} parent=0 // pred_fallthru
    _
  // Predicated region
  $region22: #{frap_forward_pallas.1} parent=0 // pred_check
    _
  $region23: #{frap_forward_pallas.1} parent=0 // pred_check_branch
    %22 = sbr.rel (0) target = $region25
  $region24: #{frap_forward_pallas.1} parent=0 // pred_region
    _
  $region25: #{frap_forward_pallas.1} parent=0 // pred_fallthru
    _
  %v23 = vld [vmem:[%s4] sm:$0x3]
  %v24 = vld [vmem:[%s4 + $0x8] sm:$0x1]
  %v25 = vld [vmem:[%s4 + $0x10] sm:$0x1]
  %v26 = vld [vmem:[%s4 + $0x18] sm:$0xf]
  %v27 = vld [vmem:[%s5] sm:$0xff]
  %v28 = vld [vmem:[%s5 + $0x8] sm:$0xff]
  %v29 = vld [vmem:[%s5 + $0x10] sm:$0x1]
  %v30 = vld [vmem:[%s5 + $0x18] sm:$0xff]
  %v31 = vld [vmem:[%s5 + $0x20] sm:$0xff]
  %v32 = vld [vmem:[%s5 + $0x28] sm:$0xf]
  %v33 = vld [vmem:[%s5 + $0x30] sm:$0x1]
  %v34 = vld [vmem:[%s5 + $0x38] sm:$0x1]
  %v35 = vld [vmem:[%s5 + $0x40] sm:$0x1]
  %v36 = vld [vmem:[%s0] sm:$0xff]
  %v37 = vld [vmem:[%s0 + $0x8] sm:$0xff]
  %v38 = vld [vmem:[%s0 + $0x10] sm:$0xff]
  %v39 = vld [vmem:[%s0 + $0x18] sm:$0xff]
  %v40 = vld [vmem:[%s0 + $0x20] sm:$0xff]
  %v41 = vld [vmem:[%s0 + $0x28] sm:$0xff]
  %vm42 = vcmp.gt.f32.partialorder %v36, 0.5
  %vm43 = vcmp.gt.f32.partialorder %v37, 0.5
  %vm44 = vcmp.gt.f32.partialorder %v38, 0.5
  %vm45 = vcmp.gt.f32.partialorder %v39, 0.5
  %vm46 = vcmp.gt.f32.partialorder %v40, 0.5
  %vm47 = vcmp.gt.f32.partialorder %v41, 0.5
  %v48 = vsel %vm42, 1, 0
  %v49 = vsel %vm43, 1, 0
  %v50 = vsel %vm44, 1, 0
  %v51 = vsel %vm45, 1, 0
  %v52 = vsel %vm46, 1, 0
  %v53 = vsel %vm47, 1, 0
  %54 = vset.pattern.permute.xlu0 0
  %55 = vperm.xlu0 %54, %v48
  %v56 = vpop.permute.xlu0 %55
  %57 = vset.pattern.permute.xlu0 0
  %58 = vperm.xlu0 %57, %v49
  %v59 = vpop.permute.xlu0 %58
  %60 = vset.pattern.permute.xlu0 0
  %61 = vperm.xlu0 %60, %v50
  %v62 = vpop.permute.xlu0 %61
  %63 = vset.pattern.permute.xlu0 0
  %64 = vperm.xlu0 %63, %v51
  %v65 = vpop.permute.xlu0 %64
  %66 = vset.pattern.permute.xlu0 0
  %67 = vperm.xlu0 %66, %v52
  %v68 = vpop.permute.xlu0 %67
  %69 = vset.pattern.permute.xlu0 0
  %70 = vperm.xlu0 %69, %v53
  %v71 = vpop.permute.xlu0 %70
  %vm72 = vcmp.eq.s32.totalorder %v56, 1
  %vm73 = vcmp.eq.s32.totalorder %v59, 1
  %vm74 = vcmp.eq.s32.totalorder %v62, 1
  %vm75 = vcmp.eq.s32.totalorder %v65, 1
  %vm76 = vcmp.eq.s32.totalorder %v68, 1
  %vm77 = vcmp.eq.s32.totalorder %v71, 1
  %v78 = vlaneseq
  %v79 = vshrl.u32 %v78, 7
  %v80 = vsub.s32 1, %v79
  %v81 = vrot.slane %v23, %v80
  %v82 = vlaneseq
  %v83 = vshrl.u32 %v82, 7
  %v84 = vsub.s32 0, %v83
  %v85 = vrot.slane %v23, %v84
  %v86 = vsel %vm72, %v81, %v85
  %v87 = vsel %vm73, %v81, %v85
  %v88 = vsel %vm74, %v81, %v85
  %v89 = vsel %vm75, %v81, %v85
  %v90 = vsel %vm76, %v81, %v85
  %v91 = vsel %vm77, %v81, %v85
  %93 = vset.pattern.permute.xlu0 1
  %94 = vperm.xlu0 %93, %v36
  %v95 = vpop.permute.xlu0 %94
  %98 = vset.pattern.permute.xlu0 1
  %99 = vperm.xlu0 %98, %v37
  %v100 = vpop.permute.xlu0 %99
  %103 = vset.pattern.permute.xlu0 1
  %104 = vperm.xlu0 %103, %v38
  %v105 = vpop.permute.xlu0 %104
  %108 = vset.pattern.permute.xlu0 1
  %109 = vperm.xlu0 %108, %v39
  %v110 = vpop.permute.xlu0 %109
  %113 = vset.pattern.permute.xlu0 1
  %114 = vperm.xlu0 %113, %v40
  %v115 = vpop.permute.xlu0 %114
  %118 = vset.pattern.permute.xlu0 1
  %119 = vperm.xlu0 %118, %v41
  %v120 = vpop.permute.xlu0 %119
  %v122 = vlaneseq
  %v123 = vshrl.u32 %v122, 7
  %v124 = vsub.s32 0, %v123
  %v125 = vrot.slane %v24, %v124
  %v126 = vmul.f32 %v95, %v125
  %v127 = vmul.f32 %v100, %v125
  %v128 = vmul.f32 %v105, %v125
  %v129 = vmul.f32 %v110, %v125
  %v130 = vmul.f32 %v115, %v125
  %v131 = vmul.f32 %v120, %v125
  %v132 = vlaneseq
  %v133 = vshrl.u32 %v132, 7
  %v134 = vsub.s32 0, %v133
  %v135 = vrot.slane %v25, %v134
  %v136 = vadd.f32 %v126, %v135
  %v137 = vadd.f32 %v127, %v135
  %v138 = vadd.f32 %v128, %v135
  %v139 = vadd.f32 %v129, %v135
  %v140 = vadd.f32 %v130, %v135
  %v141 = vadd.f32 %v131, %v135
  %v142 = vxor.u32 %v136, 2147483648
  %v143 = vxor.u32 %v137, 2147483648
  %v144 = vxor.u32 %v138, 2147483648
  %v145 = vxor.u32 %v139, 2147483648
  %v146 = vxor.u32 %v140, 2147483648
  %v147 = vxor.u32 %v141, 2147483648
  %v148 = vmul.f32 %v142, 1.442695
  %v149 = vpow.pop %v148
  %v150 = vmul.f32 %v143, 1.442695
  %v151 = vpow.pop %v150
  %v152 = vmul.f32 %v144, 1.442695
  %v153 = vpow.pop %v152
  %v154 = vmul.f32 %v145, 1.442695
  %v155 = vpow.pop %v154
  %v156 = vmul.f32 %v146, 1.442695
  %v157 = vpow.pop %v156
  %v158 = vmul.f32 %v147, 1.442695
  %v159 = vpow.pop %v158
  %v160 = vadd.f32 %v149, 1.0
  %v161 = vadd.f32 %v151, 1.0
  %v162 = vadd.f32 %v153, 1.0
  %v163 = vadd.f32 %v155, 1.0
  %v164 = vadd.f32 %v157, 1.0
  %v165 = vadd.f32 %v159, 1.0
  %v166 = vrcp.pop %v160
  %v167 = vmul.f32 1.0, %v166
  %v168 = vrcp.pop %v161
  %v169 = vmul.f32 1.0, %v168
  %v170 = vrcp.pop %v162
  %v171 = vmul.f32 1.0, %v170
  %v172 = vrcp.pop %v163
  %v173 = vmul.f32 1.0, %v172
  %v174 = vrcp.pop %v164
  %v175 = vmul.f32 1.0, %v174
  %v176 = vrcp.pop %v165
  %v177 = vmul.f32 1.0, %v176
  %179 = vset.pattern.permute.xlu0 0
  %180 = vperm.xlu0 %179, %v167
  %v181 = vpop.permute.xlu0 %180
  %184 = vset.pattern.permute.xlu0 0
  %185 = vperm.xlu0 %184, %v169
  %v186 = vpop.permute.xlu0 %185
  %189 = vset.pattern.permute.xlu0 0
  %190 = vperm.xlu0 %189, %v171
  %v191 = vpop.permute.xlu0 %190
  %194 = vset.pattern.permute.xlu0 0
  %195 = vperm.xlu0 %194, %v173
  %v196 = vpop.permute.xlu0 %195
  %199 = vset.pattern.permute.xlu0 0
  %200 = vperm.xlu0 %199, %v175
  %v201 = vpop.permute.xlu0 %200
  %204 = vset.pattern.permute.xlu0 0
  %205 = vperm.xlu0 %204, %v177
  %v206 = vpop.permute.xlu0 %205
  %v208 = vlaneseq
  %v209 = vshrl.u32 %v208, 7
  %v210 = vsub.s32 0, %v209
  %v211 = vrot.slane %v26, %v210
  %v212 = vmul.f32 %v181, %v211
  %v213 = vmul.f32 %v186, %v211
  %v214 = vmul.f32 %v191, %v211
  %v215 = vmul.f32 %v196, %v211
  %v216 = vmul.f32 %v201, %v211
  %v217 = vmul.f32 %v206, %v211
  %218 = vset.pattern.permute.xlu0 1
  %219 = vperm.xlu0 %218, %v167
  %v220 = vpop.permute.xlu0 %219
  %222 = vset.pattern.permute.xlu0 1
  %223 = vperm.xlu0 %222, %v169
  %v224 = vpop.permute.xlu0 %223
  %226 = vset.pattern.permute.xlu0 1
  %227 = vperm.xlu0 %226, %v171
  %v228 = vpop.permute.xlu0 %227
  %230 = vset.pattern.permute.xlu0 1
  %231 = vperm.xlu0 %230, %v173
  %v232 = vpop.permute.xlu0 %231
  %234 = vset.pattern.permute.xlu0 1
  %235 = vperm.xlu0 %234, %v175
  %v236 = vpop.permute.xlu0 %235
  %238 = vset.pattern.permute.xlu0 1
  %239 = vperm.xlu0 %238, %v177
  %v240 = vpop.permute.xlu0 %239
  %v242 = vlaneseq
  %v243 = vshrl.u32 %v242, 7
  %v244 = vsub.s32 1, %v243
  %v245 = vrot.slane %v26, %v244
  %v246 = vmul.f32 %v220, %v245
  %v247 = vmul.f32 %v224, %v245
  %v248 = vmul.f32 %v228, %v245
  %v249 = vmul.f32 %v232, %v245
  %v250 = vmul.f32 %v236, %v245
  %v251 = vmul.f32 %v240, %v245
  %v252 = vadd.f32 %v212, %v246
  %v253 = vadd.f32 %v213, %v247
  %v254 = vadd.f32 %v214, %v248
  %v255 = vadd.f32 %v215, %v249
  %v256 = vadd.f32 %v216, %v250
  %v257 = vadd.f32 %v217, %v251
  %258 = vset.pattern.permute.xlu0 2
  %259 = vperm.xlu0 %258, %v167
  %v260 = vpop.permute.xlu0 %259
  %262 = vset.pattern.permute.xlu0 2
  %263 = vperm.xlu0 %262, %v169
  %v264 = vpop.permute.xlu0 %263
  %266 = vset.pattern.permute.xlu0 2
  %267 = vperm.xlu0 %266, %v171
  %v268 = vpop.permute.xlu0 %267
  %270 = vset.pattern.permute.xlu0 2
  %271 = vperm.xlu0 %270, %v173
  %v272 = vpop.permute.xlu0 %271
  %274 = vset.pattern.permute.xlu0 2
  %275 = vperm.xlu0 %274, %v175
  %v276 = vpop.permute.xlu0 %275
  %278 = vset.pattern.permute.xlu0 2
  %279 = vperm.xlu0 %278, %v177
  %v280 = vpop.permute.xlu0 %279
  %v282 = vlaneseq
  %v283 = vshrl.u32 %v282, 7
  %v284 = vsub.s32 2, %v283
  %v285 = vrot.slane %v26, %v284
  %v286 = vmul.f32 %v260, %v285
  %v287 = vmul.f32 %v264, %v285
  %v288 = vmul.f32 %v268, %v285
  %v289 = vmul.f32 %v272, %v285
  %v290 = vmul.f32 %v276, %v285
  %v291 = vmul.f32 %v280, %v285
  %v292 = vadd.f32 %v252, %v286
  %v293 = vadd.f32 %v253, %v287
  %v294 = vadd.f32 %v254, %v288
  %v295 = vadd.f32 %v255, %v289
  %v296 = vadd.f32 %v256, %v290
  %v297 = vadd.f32 %v257, %v291
  %298 = vset.pattern.permute.xlu0 3
  %299 = vperm.xlu0 %298, %v167
  %v300 = vpop.permute.xlu0 %299
  %302 = vset.pattern.permute.xlu0 3
  %303 = vperm.xlu0 %302, %v169
  %v304 = vpop.permute.xlu0 %303
  %306 = vset.pattern.permute.xlu0 3
  %307 = vperm.xlu0 %306, %v171
  %v308 = vpop.permute.xlu0 %307
  %310 = vset.pattern.permute.xlu0 3
  %311 = vperm.xlu0 %310, %v173
  %v312 = vpop.permute.xlu0 %311
  %314 = vset.pattern.permute.xlu0 3
  %315 = vperm.xlu0 %314, %v175
  %v316 = vpop.permute.xlu0 %315
  %318 = vset.pattern.permute.xlu0 3
  %319 = vperm.xlu0 %318, %v177
  %v320 = vpop.permute.xlu0 %319
  %v322 = vlaneseq
  %v323 = vshrl.u32 %v322, 7
  %v324 = vsub.s32 3, %v323
  %v325 = vrot.slane %v26, %v324
  %v326 = vmul.f32 %v300, %v325
  %v327 = vmul.f32 %v304, %v325
  %v328 = vmul.f32 %v308, %v325
  %v329 = vmul.f32 %v312, %v325
  %v330 = vmul.f32 %v316, %v325
  %v331 = vmul.f32 %v320, %v325
  %v332 = vadd.f32 %v292, %v326
  %v333 = vadd.f32 %v293, %v327
  %v334 = vadd.f32 %v294, %v328
  %v335 = vadd.f32 %v295, %v329
  %v336 = vadd.f32 %v296, %v330
  %v337 = vadd.f32 %v297, %v331
  %v338 = vadd.f32 %v86, %v332
  %v339 = vadd.f32 %v87, %v333
  %v340 = vadd.f32 %v88, %v334
  %v341 = vadd.f32 %v89, %v335
  %v342 = vadd.f32 %v90, %v336
  %v343 = vadd.f32 %v91, %v337
  %v344 = vmax.f32 %v338, 0.0
  %v345 = vmax.f32 %v339, 0.0
  %v346 = vmax.f32 %v340, 0.0
  %v347 = vmax.f32 %v341, 0.0
  %v348 = vmax.f32 %v342, 0.0
  %v349 = vmax.f32 %v343, 0.0
  %vm350 = vcmask 130048
  %v352 = vsel %vm350, %v344, 0
  %v355 = vsel %vm350, %v345, 0
  %v358 = vsel %vm350, %v346, 0
  %v361 = vsel %vm350, %v347, 0
  %v364 = vsel %vm350, %v348, 0
  %v367 = vsel %vm350, %v349, 0
  %369 = vmatprep.subr.mxu0 0.0
  %370 = vmatpush1.msra.mxu0 %v27
  %371 = vmatprep.subr.mxu0 0.0
  %372 = vmatpush1.msra.mxu0 %v28
  %373 = vmatprep.subr.mxu0 0.0
  %374 = vmatpush1.msra.mxu0 0.0
  %375 = vmatprep.subr.mxu0 0.0
  %376 = vmatpush1.msra.mxu0 0.0
  %377 = vmatprep.subr.mxu0 0.0
  %378 = vmatpush1.msra.mxu0 0.0
  %379 = vmatprep.subr.mxu0 0.0
  %380 = vmatpush1.msra.mxu0 0.0
  %381 = vmatprep.subr.mxu0 0.0
  %382 = vmatpush1.msra.mxu0 0.0
  %383 = vmatprep.subr.mxu0 0.0
  %384 = vmatpush1.msra.mxu0 0.0
  %385 = vmatprep.subr.mxu0 0.0
  %386 = vmatpush1.msra.mxu0 0.0
  %387 = vmatprep.subr.mxu0 0.0
  %388 = vmatpush1.msra.mxu0 0.0
  %389 = vmatprep.subr.mxu0 0.0
  %390 = vmatpush1.msra.mxu0 0.0
  %391 = vmatprep.subr.mxu0 0.0
  %392 = vmatpush1.msra.mxu0 0.0
  %393 = vmatprep.subr.mxu0 0.0
  %394 = vmatpush1.msra.mxu0 0.0
  %395 = vmatprep.subr.mxu0 0.0
  %396 = vmatpush1.msra.mxu0 0.0
  %397 = vmatprep.subr.mxu0 0.0
  %398 = vmatpush1.msra.mxu0 0.0
  %399 = vmatprep.subr.mxu0 0.0
  %400 = vmatpush1.msra.mxu0 0.0
  %401 = vmatprep.subr.mxu0 0.0
  %402 = vmatpush1.msra.mxu0 0.0
  %403 = vmatprep.subr.mxu0 0.0
  %404 = vmatpush1.msra.mxu0 0.0
  %405 = vmatprep.subr.mxu0 0.0
  %406 = vmatpush1.msra.mxu0 0.0
  %407 = vmatprep.subr.mxu0 0.0
  %408 = vmatpush1.msra.mxu0 0.0
  %409 = vmatprep.subr.mxu0 0.0
  %410 = vmatpush1.msra.mxu0 0.0
  %411 = vmatprep.subr.mxu0 0.0
  %412 = vmatpush1.msra.mxu0 0.0
  %413 = vmatprep.subr.mxu0 0.0
  %414 = vmatpush1.msra.mxu0 0.0
  %415 = vmatprep.subr.mxu0 0.0
  %416 = vmatpush1.msra.mxu0 0.0
  %417 = vmatprep.subr.mxu0 0.0
  %418 = vmatpush1.msra.mxu0 0.0
  %419 = vmatprep.subr.mxu0 0.0
  %420 = vmatpush1.msra.mxu0 0.0
  %421 = vmatprep.subr.mxu0 0.0
  %422 = vmatpush1.msra.mxu0 0.0
  %423 = vmatprep.subr.mxu0 0.0
  %424 = vmatpush1.msra.mxu0 0.0
  %425 = vmatprep.subr.mxu0 0.0
  %426 = vmatpush1.msra.mxu0 0.0
  %427 = vmatprep.subr.mxu0 0.0
  %428 = vmatpush1.msra.mxu0 0.0
  %429 = vmatprep.subr.mxu0 0.0
  %430 = vmatpush1.msra.mxu0 0.0
  %431 = vmatprep.subr.mxu0 0.0
  %432 = vmatpush1.msra.mxu0 0.0
  %433 = vmatprep.mubr.f32.mxu0 0.0
  %434 = vmatmul.mubr.f32.gmra.mrb[0].mxu0 %v352
  %v435 = vpop.f32.mrb[0].mxu0
  %v436 = vadd.f32 0.0, %v435
  %v437 = vpop.f32.mrb[0].mxu0
  %438 = vmatprep.mubr.f32.mxu0 0.0
  %439 = vmatmul.mubr.f32.gmra.mrb[0].mxu0 %v355
  %v440 = vpop.f32.mrb[0].mxu0
  %v441 = vadd.f32 0.0, %v440
  %v442 = vpop.f32.mrb[0].mxu0
  %443 = vmatprep.mubr.f32.mxu0 0.0
  %444 = vmatmul.mubr.f32.gmra.mrb[0].mxu0 %v358
  %v445 = vpop.f32.mrb[0].mxu0
  %v446 = vadd.f32 0.0, %v445
  %v447 = vpop.f32.mrb[0].mxu0
  %448 = vmatprep.mubr.f32.mxu0 0.0
  %449 = vmatmul.mubr.f32.gmra.mrb[0].mxu0 %v361
  %v450 = vpop.f32.mrb[0].mxu0
  %v451 = vadd.f32 0.0, %v450
  %v452 = vpop.f32.mrb[0].mxu0
  %453 = vmatprep.mubr.f32.mxu0 0.0
  %454 = vmatmul.mubr.f32.gmra.mrb[0].mxu0 %v364
  %v455 = vpop.f32.mrb[0].mxu0
  %v456 = vadd.f32 0.0, %v455
  %v457 = vpop.f32.mrb[0].mxu0
  %458 = vmatprep.mubr.f32.mxu0 0.0
  %459 = vmatmul.mubr.f32.gmra.mrb[0].mxu0 %v367
  %v460 = vpop.f32.mrb[0].mxu0
  %v461 = vadd.f32 0.0, %v460
  %v462 = vpop.f32.mrb[0].mxu0
  %463 = vdwg.mxu0
  %470 = vrot.lane.b32.xlu0 %v436, 108
  %v471 = vpop.permute.xlu0 %470
  %472 = vrot.lane.b32.xlu0 %v441, 108
  %v473 = vpop.permute.xlu0 %472
  %474 = vrot.lane.b32.xlu0 %v446, 108
  %v475 = vpop.permute.xlu0 %474
  %476 = vrot.lane.b32.xlu0 %v451, 108
  %v477 = vpop.permute.xlu0 %476
  %478 = vrot.lane.b32.xlu0 %v456, 108
  %v479 = vpop.permute.xlu0 %478
  %480 = vrot.lane.b32.xlu0 %v461, 108
  %v481 = vpop.permute.xlu0 %480
  %v488 = vld [vmem:[%s1] sm:$0xff]
  %v489 = vld [vmem:[%s1 + $0x8] sm:$0xff]
  %v490 = vld [vmem:[%s1 + $0x10] sm:$0xff]
  %v491 = vld [vmem:[%s1 + $0x18] sm:$0xff]
  %v492 = vld [vmem:[%s1 + $0x20] sm:$0xff]
  %v493 = vld [vmem:[%s1 + $0x28] sm:$0xff]
  %v494 = vld [vmem:[%s1 + $0x30] sm:$0xff]
  %v495 = vld [vmem:[%s1 + $0x38] sm:$0xff]
  %v496 = vld [vmem:[%s1 + $0x40] sm:$0xff]
  %v497 = vld [vmem:[%s1 + $0x48] sm:$0xff]
  %v498 = vld [vmem:[%s1 + $0x50] sm:$0xff]
  %v499 = vld [vmem:[%s1 + $0x58] sm:$0xff]
  %v500 = vld [vmem:[%s1 + $0x60] sm:$0xff]
  %v501 = vld [vmem:[%s1 + $0x68] sm:$0xff]
  %v502 = vld [vmem:[%s1 + $0x70] sm:$0xff]
  %v503 = vld [vmem:[%s1 + $0x78] sm:$0xff]
  %v504 = vld [vmem:[%s1 + $0x80] sm:$0xff]
  %v505 = vld [vmem:[%s1 + $0x88] sm:$0xff]
  %v506 = vld [vmem:[%s1 + $0x90] sm:$0xff]
  %v507 = vld [vmem:[%s1 + $0x98] sm:$0xff]
  %v508 = vld [vmem:[%s1 + $0xa0] sm:$0xff]
  %v509 = vld [vmem:[%s1 + $0xa8] sm:$0xff]
  %v510 = vld [vmem:[%s1 + $0xb0] sm:$0xff]
  %v511 = vld [vmem:[%s1 + $0xb8] sm:$0xff]
  %v512 = vld [vmem:[%s1 + $0xc0] sm:$0xff]
  %v513 = vld [vmem:[%s1 + $0xc8] sm:$0xff]
  %v514 = vld [vmem:[%s1 + $0xd0] sm:$0xff]
  %v515 = vld [vmem:[%s1 + $0xd8] sm:$0xff]
  %v516 = vlaneseq
  %v517 = vshrl.u32 %v516, 7
  %v518 = vsub.s32 0, %v517
  %v519 = vrot.slane %v29, %v518
  %vm520 = vcmask 785408
  %v522 = vsel %vm520, %v488, 0
  %v525 = vsel %vm520, %v489, 0
  %v528 = vsel %vm520, %v490, 0
  %v531 = vsel %vm520, %v491, 0
  %v534 = vsel %vm520, %v492, 0
  %v537 = vsel %vm520, %v493, 0
  %v540 = vsel %vm520, %v494, 0
  %v543 = vsel %vm520, %v495, 0
  %v546 = vsel %vm520, %v496, 0
  %v549 = vsel %vm520, %v497, 0
  %v552 = vsel %vm520, %v498, 0
  %v555 = vsel %vm520, %v499, 0
  %v558 = vsel %vm520, %v500, 0
  %v561 = vsel %vm520, %v501, 0
  %v564 = vsel %vm520, %v502, 0
  %v567 = vsel %vm520, %v503, 0
  %v570 = vsel %vm520, %v504, 0
  %v573 = vsel %vm520, %v505, 0
  %v576 = vsel %vm520, %v506, 0
  %v579 = vsel %vm520, %v507, 0
  %v582 = vsel %vm520, %v508, 0
  %v585 = vsel %vm520, %v509, 0
  %v588 = vsel %vm520, %v510, 0
  %v591 = vsel %vm520, %v511, 0
  %v594 = vsel %vm520, %v512, 0
  %v597 = vsel %vm520, %v513, 0
  %v600 = vsel %vm520, %v514, 0
  %v603 = vsel %vm520, %v515, 0
  %605 = vmatprep.subr.mxu0 0.0
  %606 = vmatpush1.msra.mxu0 %v436
  %607 = vmatprep.subr.mxu0 0.0
  %608 = vmatpush1.msra.mxu0 %v441
  %609 = vmatprep.subr.mxu0 0.0
  %610 = vmatpush1.msra.mxu0 %v446
  %611 = vmatprep.subr.mxu0 0.0
  %612 = vmatpush1.msra.mxu0 %v451
  %613 = vmatprep.subr.mxu0 0.0
  %614 = vmatpush1.msra.mxu0 %v456
  %615 = vmatprep.subr.mxu0 0.0
  %616 = vmatpush1.msra.mxu0 %v461
  %617 = vmatprep.subr.mxu0 0.0
  %618 = vmatpush1.msra.mxu0 %v471
  %619 = vmatprep.subr.mxu0 0.0
  %620 = vmatpush1.msra.mxu0 %v473
  %621 = vmatprep.subr.mxu0 0.0
  %622 = vmatpush1.msra.mxu0 %v475
  %623 = vmatprep.subr.mxu0 0.0
  %624 = vmatpush1.msra.mxu0 %v477
  %625 = vmatprep.subr.mxu0 0.0
  %626 = vmatpush1.msra.mxu0 %v479
  %627 = vmatprep.subr.mxu0 0.0
  %628 = vmatpush1.msra.mxu0 %v481
  %629 = vmatprep.subr.mxu0 0.0
  %630 = vmatpush1.msra.mxu0 0.0
  %631 = vmatprep.subr.mxu0 0.0
  %632 = vmatpush1.msra.mxu0 0.0
  %633 = vmatprep.subr.mxu0 0.0
  %634 = vmatpush1.msra.mxu0 0.0
  %635 = vmatprep.subr.mxu0 0.0
  %636 = vmatpush1.msra.mxu0 0.0
  %637 = vmatprep.subr.mxu0 0.0
  %638 = vmatpush1.msra.mxu0 0.0
  %639 = vmatprep.subr.mxu0 0.0
  %640 = vmatpush1.msra.mxu0 0.0
  %641 = vmatprep.subr.mxu0 0.0
  %642 = vmatpush1.msra.mxu0 0.0
  %643 = vmatprep.subr.mxu0 0.0
  %644 = vmatpush1.msra.mxu0 0.0
  %645 = vmatprep.subr.mxu0 0.0
  %646 = vmatpush1.msra.mxu0 0.0
  %647 = vmatprep.subr.mxu0 0.0
  %648 = vmatpush1.msra.mxu0 0.0
  %649 = vmatprep.subr.mxu0 0.0
  %650 = vmatpush1.msra.mxu0 0.0
  %651 = vmatprep.subr.mxu0 0.0
  %652 = vmatpush1.msra.mxu0 0.0
  %653 = vmatprep.subr.mxu0 0.0
  %654 = vmatpush1.msra.mxu0 0.0
  %655 = vmatprep.subr.mxu0 0.0
  %656 = vmatpush1.msra.mxu0 0.0
  %657 = vmatprep.subr.mxu0 0.0
  %658 = vmatpush1.msra.mxu0 0.0
  %659 = vmatprep.subr.mxu0 0.0
  %660 = vmatpush1.msra.mxu0 0.0
  %661 = vmatprep.subr.mxu0 0.0
  %662 = vmatpush1.msra.mxu0 0.0
  %663 = vmatprep.subr.mxu0 0.0
  %664 = vmatpush1.msra.mxu0 0.0
  %665 = vmatprep.subr.mxu0 0.0
  %666 = vmatpush1.msra.mxu0 0.0
  %667 = vmatprep.subr.mxu0 0.0
  %668 = vmatpush1.msra.mxu0 0.0
  %669 = vmatprep.mubr.f32.mxu0 0.0
  %670 = vmatmul.mubr.f32.gmra.mrb[0].mxu0 %v522
  %v671 = vpop.f32.mrb[0].mxu0
  %v672 = vadd.f32 %v519, %v671
  %v673 = vpop.f32.mrb[0].mxu0
  %674 = vmatprep.mubr.f32.mxu0 0.0
  %675 = vmatmul.mubr.f32.gmra.mrb[0].mxu0 %v525
  %v676 = vpop.f32.mrb[0].mxu0
  %v677 = vadd.f32 %v519, %v676
  %v678 = vpop.f32.mrb[0].mxu0
  %679 = vmatprep.mubr.f32.mxu0 0.0
  %680 = vmatmul.mubr.f32.gmra.mrb[0].mxu0 %v528
  %v681 = vpop.f32.mrb[0].mxu0
  %v682 = vadd.f32 %v519, %v681
  %v683 = vpop.f32.mrb[0].mxu0
  %684 = vmatprep.mubr.f32.mxu0 0.0
  %685 = vmatmul.mubr.f32.gmra.mrb[0].mxu0 %v531
  %v686 = vpop.f32.mrb[0].mxu0
  %v687 = vadd.f32 %v519, %v686
  %v688 = vpop.f32.mrb[0].mxu0
  %689 = vmatprep.mubr.f32.mxu0 0.0
  %690 = vmatmul.mubr.f32.gmra.mrb[0].mxu0 %v534
  %v691 = vpop.f32.mrb[0].mxu0
  %v692 = vadd.f32 %v519, %v691
  %v693 = vpop.f32.mrb[0].mxu0
  %694 = vmatprep.mubr.f32.mxu0 0.0
  %695 = vmatmul.mubr.f32.gmra.mrb[0].mxu0 %v537
  %v696 = vpop.f32.mrb[0].mxu0
  %v697 = vadd.f32 %v519, %v696
  %v698 = vpop.f32.mrb[0].mxu0
  %699 = vmatprep.mubr.f32.mxu0 0.0
  %700 = vmatmul.mubr.f32.gmra.mrb[0].mxu0 %v540
  %v701 = vpop.f32.mrb[0].mxu0
  %v702 = vadd.f32 %v519, %v701
  %v703 = vpop.f32.mrb[0].mxu0
  %704 = vmatprep.mubr.f32.mxu0 0.0
  %705 = vmatmul.mubr.f32.gmra.mrb[0].mxu0 %v543
  %v706 = vpop.f32.mrb[0].mxu0
  %v707 = vadd.f32 %v519, %v706
  %v708 = vpop.f32.mrb[0].mxu0
  %709 = vmatprep.mubr.f32.mxu0 0.0
  %710 = vmatmul.mubr.f32.gmra.mrb[0].mxu0 %v546
  %v711 = vpop.f32.mrb[0].mxu0
  %v712 = vadd.f32 %v519, %v711
  %v713 = vpop.f32.mrb[0].mxu0
  %714 = vmatprep.mubr.f32.mxu0 0.0
  %715 = vmatmul.mubr.f32.gmra.mrb[0].mxu0 %v549
  %v716 = vpop.f32.mrb[0].mxu0
  %v717 = vadd.f32 %v519, %v716
  %v718 = vpop.f32.mrb[0].mxu0
  %719 = vmatprep.mubr.f32.mxu0 0.0
  %720 = vmatmul.mubr.f32.gmra.mrb[0].mxu0 %v552
  %v721 = vpop.f32.mrb[0].mxu0
  %v722 = vadd.f32 %v519, %v721
  %v723 = vpop.f32.mrb[0].mxu0
  %724 = vmatprep.mubr.f32.mxu0 0.0
  %725 = vmatmul.mubr.f32.gmra.mrb[0].mxu0 %v555
  %v726 = vpop.f32.mrb[0].mxu0
  %v727 = vadd.f32 %v519, %v726
  %v728 = vpop.f32.mrb[0].mxu0
  %729 = vmatprep.mubr.f32.mxu0 0.0
  %730 = vmatmul.mubr.f32.gmra.mrb[0].mxu0 %v558
  %v731 = vpop.f32.mrb[0].mxu0
  %v732 = vadd.f32 %v519, %v731
  %v733 = vpop.f32.mrb[0].mxu0
  %734 = vmatprep.mubr.f32.mxu0 0.0
  %735 = vmatmul.mubr.f32.gmra.mrb[0].mxu0 %v561
  %v736 = vpop.f32.mrb[0].mxu0
  %v737 = vadd.f32 %v519, %v736
  %v738 = vpop.f32.mrb[0].mxu0
  %739 = vmatprep.mubr.f32.mxu0 0.0
  %740 = vmatmul.mubr.f32.gmra.mrb[0].mxu0 %v564
  %v741 = vpop.f32.mrb[0].mxu0
  %v742 = vadd.f32 %v519, %v741
  %v743 = vpop.f32.mrb[0].mxu0
  %744 = vmatprep.mubr.f32.mxu0 0.0
  %745 = vmatmul.mubr.f32.gmra.mrb[0].mxu0 %v567
  %v746 = vpop.f32.mrb[0].mxu0
  %v747 = vadd.f32 %v519, %v746
  %v748 = vpop.f32.mrb[0].mxu0
  %749 = vmatprep.mubr.f32.mxu0 0.0
  %750 = vmatmul.mubr.f32.gmra.mrb[0].mxu0 %v570
  %v751 = vpop.f32.mrb[0].mxu0
  %v752 = vadd.f32 %v519, %v751
  %v753 = vpop.f32.mrb[0].mxu0
  %754 = vmatprep.mubr.f32.mxu0 0.0
  %755 = vmatmul.mubr.f32.gmra.mrb[0].mxu0 %v573
  %v756 = vpop.f32.mrb[0].mxu0
  %v757 = vadd.f32 %v519, %v756
  %v758 = vpop.f32.mrb[0].mxu0
  %759 = vmatprep.mubr.f32.mxu0 0.0
  %760 = vmatmul.mubr.f32.gmra.mrb[0].mxu0 %v576
  %v761 = vpop.f32.mrb[0].mxu0
  %v762 = vadd.f32 %v519, %v761
  %v763 = vpop.f32.mrb[0].mxu0
  %764 = vmatprep.mubr.f32.mxu0 0.0
  %765 = vmatmul.mubr.f32.gmra.mrb[0].mxu0 %v579
  %v766 = vpop.f32.mrb[0].mxu0
  %v767 = vadd.f32 %v519, %v766
  %v768 = vpop.f32.mrb[0].mxu0
  %769 = vmatprep.mubr.f32.mxu0 0.0
  %770 = vmatmul.mubr.f32.gmra.mrb[0].mxu0 %v582
  %v771 = vpop.f32.mrb[0].mxu0
  %v772 = vadd.f32 %v519, %v771
  %v773 = vpop.f32.mrb[0].mxu0
  %774 = vmatprep.mubr.f32.mxu0 0.0
  %775 = vmatmul.mubr.f32.gmra.mrb[0].mxu0 %v585
  %v776 = vpop.f32.mrb[0].mxu0
  %v777 = vadd.f32 %v519, %v776
  %v778 = vpop.f32.mrb[0].mxu0
  %779 = vmatprep.mubr.f32.mxu0 0.0
  %780 = vmatmul.mubr.f32.gmra.mrb[0].mxu0 %v588
  %v781 = vpop.f32.mrb[0].mxu0
  %v782 = vadd.f32 %v519, %v781
  %v783 = vpop.f32.mrb[0].mxu0
  %784 = vmatprep.mubr.f32.mxu0 0.0
  %785 = vmatmul.mubr.f32.gmra.mrb[0].mxu0 %v591
  %v786 = vpop.f32.mrb[0].mxu0
  %v787 = vadd.f32 %v519, %v786
  %v788 = vpop.f32.mrb[0].mxu0
  %789 = vmatprep.mubr.f32.mxu0 0.0
  %790 = vmatmul.mubr.f32.gmra.mrb[0].mxu0 %v594
  %v791 = vpop.f32.mrb[0].mxu0
  %v792 = vadd.f32 %v519, %v791
  %v793 = vpop.f32.mrb[0].mxu0
  %794 = vmatprep.mubr.f32.mxu0 0.0
  %795 = vmatmul.mubr.f32.gmra.mrb[0].mxu0 %v597
  %v796 = vpop.f32.mrb[0].mxu0
  %v797 = vadd.f32 %v519, %v796
  %v798 = vpop.f32.mrb[0].mxu0
  %799 = vmatprep.mubr.f32.mxu0 0.0
  %800 = vmatmul.mubr.f32.gmra.mrb[0].mxu0 %v600
  %v801 = vpop.f32.mrb[0].mxu0
  %v802 = vadd.f32 %v519, %v801
  %v803 = vpop.f32.mrb[0].mxu0
  %804 = vmatprep.mubr.f32.mxu0 0.0
  %805 = vmatmul.mubr.f32.gmra.mrb[0].mxu0 %v603
  %v806 = vpop.f32.mrb[0].mxu0
  %v807 = vadd.f32 %v519, %v806
  %v808 = vpop.f32.mrb[0].mxu0
  %809 = vdwg.mxu0
  %v810 = vmax.f32 %v672, 0.0
  %v811 = vmax.f32 %v677, 0.0
  %v812 = vmax.f32 %v682, 0.0
  %v813 = vmax.f32 %v687, 0.0
  %v814 = vmax.f32 %v692, 0.0
  %v815 = vmax.f32 %v697, 0.0
  %v816 = vmax.f32 %v702, 0.0
  %v817 = vmax.f32 %v707, 0.0
  %v818 = vmax.f32 %v712, 0.0
  %v819 = vmax.f32 %v717, 0.0
  %v820 = vmax.f32 %v722, 0.0
  %v821 = vmax.f32 %v727, 0.0
  %v822 = vmax.f32 %v732, 0.0
  %v823 = vmax.f32 %v737, 0.0
  %v824 = vmax.f32 %v742, 0.0
  %v825 = vmax.f32 %v747, 0.0
  %v826 = vmax.f32 %v752, 0.0
  %v827 = vmax.f32 %v757, 0.0
  %v828 = vmax.f32 %v762, 0.0
  %v829 = vmax.f32 %v767, 0.0
  %v830 = vmax.f32 %v772, 0.0
  %v831 = vmax.f32 %v777, 0.0
  %v832 = vmax.f32 %v782, 0.0
  %v833 = vmax.f32 %v787, 0.0
  %v834 = vmax.f32 %v792, 0.0
  %v835 = vmax.f32 %v797, 0.0
  %v836 = vmax.f32 %v802, 0.0
  %v837 = vmax.f32 %v807, 0.0
  %v838 = vld [vmem:[%s3] sm:$0xff]
  %v839 = vld [vmem:[%s3 + $0x8] sm:$0xff]
  %v840 = vld [vmem:[%s3 + $0x10] sm:$0xff]
  %v841 = vld [vmem:[%s3 + $0x18] sm:$0xff]
  %v842 = vld [vmem:[%s3 + $0x20] sm:$0xff]
  %v843 = vld [vmem:[%s3 + $0x28] sm:$0xff]
  %v844 = vld [vmem:[%s3 + $0x30] sm:$0xff]
  %v845 = vld [vmem:[%s3 + $0x38] sm:$0xff]
  %v846 = vld [vmem:[%s3 + $0x40] sm:$0xff]
  %v847 = vld [vmem:[%s3 + $0x48] sm:$0xff]
  %v848 = vld [vmem:[%s3 + $0x50] sm:$0xff]
  %v849 = vld [vmem:[%s3 + $0x58] sm:$0xff]
  %v850 = vld [vmem:[%s3 + $0x60] sm:$0xff]
  %v851 = vld [vmem:[%s3 + $0x68] sm:$0xff]
  %v852 = vld [vmem:[%s3 + $0x70] sm:$0xff]
  %v853 = vld [vmem:[%s3 + $0x78] sm:$0xff]
  %v854 = vld [vmem:[%s3 + $0x80] sm:$0xff]
  %v855 = vld [vmem:[%s3 + $0x88] sm:$0xff]
  %v856 = vld [vmem:[%s3 + $0x90] sm:$0xff]
  %v857 = vld [vmem:[%s3 + $0x98] sm:$0xff]
  %v858 = vld [vmem:[%s3 + $0xa0] sm:$0xff]
  %v859 = vld [vmem:[%s3 + $0xa8] sm:$0xff]
  %v860 = vld [vmem:[%s3 + $0xb0] sm:$0xff]
  %v861 = vld [vmem:[%s3 + $0xb8] sm:$0xff]
  %v862 = vld [vmem:[%s3 + $0xc0] sm:$0xff]
  %v863 = vld [vmem:[%s3 + $0xc8] sm:$0xff]
  %v864 = vld [vmem:[%s3 + $0xd0] sm:$0xff]
  %v865 = vld [vmem:[%s3 + $0xd8] sm:$0xff]
  %v866 = vmul.f32 %v810, %v838
  %v867 = vmul.f32 %v811, %v839
  %v868 = vmul.f32 %v812, %v840
  %v869 = vmul.f32 %v813, %v841
  %v870 = vmul.f32 %v814, %v842
  %v871 = vmul.f32 %v815, %v843
  %v872 = vmul.f32 %v816, %v844
  %v873 = vmul.f32 %v817, %v845
  %v874 = vmul.f32 %v818, %v846
  %v875 = vmul.f32 %v819, %v847
  %v876 = vmul.f32 %v820, %v848
  %v877 = vmul.f32 %v821, %v849
  %v878 = vmul.f32 %v822, %v850
  %v879 = vmul.f32 %v823, %v851
  %v880 = vmul.f32 %v824, %v852
  %v881 = vmul.f32 %v825, %v853
  %v882 = vmul.f32 %v826, %v854
  %v883 = vmul.f32 %v827, %v855
  %v884 = vmul.f32 %v828, %v856
  %v885 = vmul.f32 %v829, %v857
  %v886 = vmul.f32 %v830, %v858
  %v887 = vmul.f32 %v831, %v859
  %v888 = vmul.f32 %v832, %v860
  %v889 = vmul.f32 %v833, %v861
  %v890 = vmul.f32 %v834, %v862
  %v891 = vmul.f32 %v835, %v863
  %v892 = vmul.f32 %v836, %v864
  %v893 = vmul.f32 %v837, %v865
  %v894 = vlaneseq
  %v895 = vshrl.u32 %v894, 7
  %v896 = vsub.s32 0, %v895
  %v897 = vrot.slane %v33, %v896
  %vm898 = vcmask 162816
  %v900 = vsel %vm898, %v866, 0
  %v903 = vsel %vm898, %v867, 0
  %v906 = vsel %vm898, %v868, 0
  %v909 = vsel %vm898, %v869, 0
  %v912 = vsel %vm898, %v870, 0
  %v915 = vsel %vm898, %v871, 0
  %v918 = vsel %vm898, %v872, 0
  %v921 = vsel %vm898, %v873, 0
  %v924 = vsel %vm898, %v874, 0
  %v927 = vsel %vm898, %v875, 0
  %v930 = vsel %vm898, %v876, 0
  %v933 = vsel %vm898, %v877, 0
  %v936 = vsel %vm898, %v878, 0
  %v939 = vsel %vm898, %v879, 0
  %v942 = vsel %vm898, %v880, 0
  %v945 = vsel %vm898, %v881, 0
  %v948 = vsel %vm898, %v882, 0
  %v951 = vsel %vm898, %v883, 0
  %v954 = vsel %vm898, %v884, 0
  %v957 = vsel %vm898, %v885, 0
  %v960 = vsel %vm898, %v886, 0
  %v963 = vsel %vm898, %v887, 0
  %v966 = vsel %vm898, %v888, 0
  %v969 = vsel %vm898, %v889, 0
  %v972 = vsel %vm898, %v890, 0
  %v975 = vsel %vm898, %v891, 0
  %v978 = vsel %vm898, %v892, 0
  %v981 = vsel %vm898, %v893, 0
  %vm983 = vcmask 1043456
  %v985 = vsel %vm983, %v32, 0
  %987 = vmatprep.subr.mxu0 0.0
  %988 = vmatpush1.msra.mxu0 %v30
  %989 = vmatprep.subr.mxu0 0.0
  %990 = vmatpush1.msra.mxu0 %v31
  %991 = vmatprep.subr.mxu0 0.0
  %992 = vmatpush1.msra.mxu0 %v985
  %993 = vmatprep.subr.mxu0 0.0
  %994 = vmatpush1.msra.mxu0 0.0
  %995 = vmatprep.subr.mxu0 0.0
  %996 = vmatpush1.msra.mxu0 0.0
  %997 = vmatprep.subr.mxu0 0.0
  %998 = vmatpush1.msra.mxu0 0.0
  %999 = vmatprep.subr.mxu0 0.0
  %1000 = vmatpush1.msra.mxu0 0.0
  %1001 = vmatprep.subr.mxu0 0.0
  %1002 = vmatpush1.msra.mxu0 0.0
  %1003 = vmatprep.subr.mxu0 0.0
  %1004 = vmatpush1.msra.mxu0 0.0
  %1005 = vmatprep.subr.mxu0 0.0
  %1006 = vmatpush1.msra.mxu0 0.0
  %1007 = vmatprep.subr.mxu0 0.0
  %1008 = vmatpush1.msra.mxu0 0.0
  %1009 = vmatprep.subr.mxu0 0.0
  %1010 = vmatpush1.msra.mxu0 0.0
  %1011 = vmatprep.subr.mxu0 0.0
  %1012 = vmatpush1.msra.mxu0 0.0
  %1013 = vmatprep.subr.mxu0 0.0
  %1014 = vmatpush1.msra.mxu0 0.0
  %1015 = vmatprep.subr.mxu0 0.0
  %1016 = vmatpush1.msra.mxu0 0.0
  %1017 = vmatprep.subr.mxu0 0.0
  %1018 = vmatpush1.msra.mxu0 0.0
  %1019 = vmatprep.subr.mxu0 0.0
  %1020 = vmatpush1.msra.mxu0 0.0
  %1021 = vmatprep.subr.mxu0 0.0
  %1022 = vmatpush1.msra.mxu0 0.0
  %1023 = vmatprep.subr.mxu0 0.0
  %1024 = vmatpush1.msra.mxu0 0.0
  %1025 = vmatprep.subr.mxu0 0.0
  %1026 = vmatpush1.msra.mxu0 0.0
  %1027 = vmatprep.subr.mxu0 0.0
  %1028 = vmatpush1.msra.mxu0 0.0
  %1029 = vmatprep.subr.mxu0 0.0
  %1030 = vmatpush1.msra.mxu0 0.0
  %1031 = vmatprep.subr.mxu0 0.0
  %1032 = vmatpush1.msra.mxu0 0.0
  %1033 = vmatprep.subr.mxu0 0.0
  %1034 = vmatpush1.msra.mxu0 0.0
  %1035 = vmatprep.subr.mxu0 0.0
  %1036 = vmatpush1.msra.mxu0 0.0
  %1037 = vmatprep.subr.mxu0 0.0
  %1038 = vmatpush1.msra.mxu0 0.0
  %1039 = vmatprep.subr.mxu0 0.0
  %1040 = vmatpush1.msra.mxu0 0.0
  %1041 = vmatprep.subr.mxu0 0.0
  %1042 = vmatpush1.msra.mxu0 0.0
  %1043 = vmatprep.subr.mxu0 0.0
  %1044 = vmatpush1.msra.mxu0 0.0
  %1045 = vmatprep.subr.mxu0 0.0
  %1046 = vmatpush1.msra.mxu0 0.0
  %1047 = vmatprep.subr.mxu0 0.0
  %1048 = vmatpush1.msra.mxu0 0.0
  %1049 = vmatprep.subr.mxu0 0.0
  %1050 = vmatpush1.msra.mxu0 0.0
  %1051 = vmatprep.mubr.f32.mxu0 0.0
  %1052 = vmatmul.mubr.f32.gmra.mrb[0].mxu0 %v900
  %v1053 = vpop.f32.mrb[0].mxu0
  %v1054 = vadd.f32 %v897, %v1053
  %v1055 = vpop.f32.mrb[0].mxu0
  %1056 = vmatprep.mubr.f32.mxu0 0.0
  %1057 = vmatmul.mubr.f32.gmra.mrb[0].mxu0 %v903
  %v1058 = vpop.f32.mrb[0].mxu0
  %v1059 = vadd.f32 %v897, %v1058
  %v1060 = vpop.f32.mrb[0].mxu0
  %1061 = vmatprep.mubr.f32.mxu0 0.0
  %1062 = vmatmul.mubr.f32.gmra.mrb[0].mxu0 %v906
  %v1063 = vpop.f32.mrb[0].mxu0
  %v1064 = vadd.f32 %v897, %v1063
  %v1065 = vpop.f32.mrb[0].mxu0
  %1066 = vmatprep.mubr.f32.mxu0 0.0
  %1067 = vmatmul.mubr.f32.gmra.mrb[0].mxu0 %v909
  %v1068 = vpop.f32.mrb[0].mxu0
  %v1069 = vadd.f32 %v897, %v1068
  %v1070 = vpop.f32.mrb[0].mxu0
  %1071 = vmatprep.mubr.f32.mxu0 0.0
  %1072 = vmatmul.mubr.f32.gmra.mrb[0].mxu0 %v912
  %v1073 = vpop.f32.mrb[0].mxu0
  %v1074 = vadd.f32 %v897, %v1073
  %v1075 = vpop.f32.mrb[0].mxu0
  %1076 = vmatprep.mubr.f32.mxu0 0.0
  %1077 = vmatmul.mubr.f32.gmra.mrb[0].mxu0 %v915
  %v1078 = vpop.f32.mrb[0].mxu0
  %v1079 = vadd.f32 %v897, %v1078
  %v1080 = vpop.f32.mrb[0].mxu0
  %1081 = vmatprep.mubr.f32.mxu0 0.0
  %1082 = vmatmul.mubr.f32.gmra.mrb[0].mxu0 %v918
  %v1083 = vpop.f32.mrb[0].mxu0
  %v1084 = vadd.f32 %v897, %v1083
  %v1085 = vpop.f32.mrb[0].mxu0
  %1086 = vmatprep.mubr.f32.mxu0 0.0
  %1087 = vmatmul.mubr.f32.gmra.mrb[0].mxu0 %v921
  %v1088 = vpop.f32.mrb[0].mxu0
  %v1089 = vadd.f32 %v897, %v1088
  %v1090 = vpop.f32.mrb[0].mxu0
  %1091 = vmatprep.mubr.f32.mxu0 0.0
  %1092 = vmatmul.mubr.f32.gmra.mrb[0].mxu0 %v924
  %v1093 = vpop.f32.mrb[0].mxu0
  %v1094 = vadd.f32 %v897, %v1093
  %v1095 = vpop.f32.mrb[0].mxu0
  %1096 = vmatprep.mubr.f32.mxu0 0.0
  %1097 = vmatmul.mubr.f32.gmra.mrb[0].mxu0 %v927
  %v1098 = vpop.f32.mrb[0].mxu0
  %v1099 = vadd.f32 %v897, %v1098
  %v1100 = vpop.f32.mrb[0].mxu0
  %1101 = vmatprep.mubr.f32.mxu0 0.0
  %1102 = vmatmul.mubr.f32.gmra.mrb[0].mxu0 %v930
  %v1103 = vpop.f32.mrb[0].mxu0
  %v1104 = vadd.f32 %v897, %v1103
  %v1105 = vpop.f32.mrb[0].mxu0
  %1106 = vmatprep.mubr.f32.mxu0 0.0
  %1107 = vmatmul.mubr.f32.gmra.mrb[0].mxu0 %v933
  %v1108 = vpop.f32.mrb[0].mxu0
  %v1109 = vadd.f32 %v897, %v1108
  %v1110 = vpop.f32.mrb[0].mxu0
  %1111 = vmatprep.mubr.f32.mxu0 0.0
  %1112 = vmatmul.mubr.f32.gmra.mrb[0].mxu0 %v936
  %v1113 = vpop.f32.mrb[0].mxu0
  %v1114 = vadd.f32 %v897, %v1113
  %v1115 = vpop.f32.mrb[0].mxu0
  %1116 = vmatprep.mubr.f32.mxu0 0.0
  %1117 = vmatmul.mubr.f32.gmra.mrb[0].mxu0 %v939
  %v1118 = vpop.f32.mrb[0].mxu0
  %v1119 = vadd.f32 %v897, %v1118
  %v1120 = vpop.f32.mrb[0].mxu0
  %1121 = vmatprep.mubr.f32.mxu0 0.0
  %1122 = vmatmul.mubr.f32.gmra.mrb[0].mxu0 %v942
  %v1123 = vpop.f32.mrb[0].mxu0
  %v1124 = vadd.f32 %v897, %v1123
  %v1125 = vpop.f32.mrb[0].mxu0
  %1126 = vmatprep.mubr.f32.mxu0 0.0
  %1127 = vmatmul.mubr.f32.gmra.mrb[0].mxu0 %v945
  %v1128 = vpop.f32.mrb[0].mxu0
  %v1129 = vadd.f32 %v897, %v1128
  %v1130 = vpop.f32.mrb[0].mxu0
  %1131 = vmatprep.mubr.f32.mxu0 0.0
  %1132 = vmatmul.mubr.f32.gmra.mrb[0].mxu0 %v948
  %v1133 = vpop.f32.mrb[0].mxu0
  %v1134 = vadd.f32 %v897, %v1133
  %v1135 = vpop.f32.mrb[0].mxu0
  %1136 = vmatprep.mubr.f32.mxu0 0.0
  %1137 = vmatmul.mubr.f32.gmra.mrb[0].mxu0 %v951
  %v1138 = vpop.f32.mrb[0].mxu0
  %v1139 = vadd.f32 %v897, %v1138
  %v1140 = vpop.f32.mrb[0].mxu0
  %1141 = vmatprep.mubr.f32.mxu0 0.0
  %1142 = vmatmul.mubr.f32.gmra.mrb[0].mxu0 %v954
  %v1143 = vpop.f32.mrb[0].mxu0
  %v1144 = vadd.f32 %v897, %v1143
  %v1145 = vpop.f32.mrb[0].mxu0
  %1146 = vmatprep.mubr.f32.mxu0 0.0
  %1147 = vmatmul.mubr.f32.gmra.mrb[0].mxu0 %v957
  %v1148 = vpop.f32.mrb[0].mxu0
  %v1149 = vadd.f32 %v897, %v1148
  %v1150 = vpop.f32.mrb[0].mxu0
  %1151 = vmatprep.mubr.f32.mxu0 0.0
  %1152 = vmatmul.mubr.f32.gmra.mrb[0].mxu0 %v960
  %v1153 = vpop.f32.mrb[0].mxu0
  %v1154 = vadd.f32 %v897, %v1153
  %v1155 = vpop.f32.mrb[0].mxu0
  %1156 = vmatprep.mubr.f32.mxu0 0.0
  %1157 = vmatmul.mubr.f32.gmra.mrb[0].mxu0 %v963
  %v1158 = vpop.f32.mrb[0].mxu0
  %v1159 = vadd.f32 %v897, %v1158
  %v1160 = vpop.f32.mrb[0].mxu0
  %1161 = vmatprep.mubr.f32.mxu0 0.0
  %1162 = vmatmul.mubr.f32.gmra.mrb[0].mxu0 %v966
  %v1163 = vpop.f32.mrb[0].mxu0
  %v1164 = vadd.f32 %v897, %v1163
  %v1165 = vpop.f32.mrb[0].mxu0
  %1166 = vmatprep.mubr.f32.mxu0 0.0
  %1167 = vmatmul.mubr.f32.gmra.mrb[0].mxu0 %v969
  %v1168 = vpop.f32.mrb[0].mxu0
  %v1169 = vadd.f32 %v897, %v1168
  %v1170 = vpop.f32.mrb[0].mxu0
  %1171 = vmatprep.mubr.f32.mxu0 0.0
  %1172 = vmatmul.mubr.f32.gmra.mrb[0].mxu0 %v972
  %v1173 = vpop.f32.mrb[0].mxu0
  %v1174 = vadd.f32 %v897, %v1173
  %v1175 = vpop.f32.mrb[0].mxu0
  %1176 = vmatprep.mubr.f32.mxu0 0.0
  %1177 = vmatmul.mubr.f32.gmra.mrb[0].mxu0 %v975
  %v1178 = vpop.f32.mrb[0].mxu0
  %v1179 = vadd.f32 %v897, %v1178
  %v1180 = vpop.f32.mrb[0].mxu0
  %1181 = vmatprep.mubr.f32.mxu0 0.0
  %1182 = vmatmul.mubr.f32.gmra.mrb[0].mxu0 %v978
  %v1183 = vpop.f32.mrb[0].mxu0
  %v1184 = vadd.f32 %v897, %v1183
  %v1185 = vpop.f32.mrb[0].mxu0
  %1186 = vmatprep.mubr.f32.mxu0 0.0
  %1187 = vmatmul.mubr.f32.gmra.mrb[0].mxu0 %v981
  %v1188 = vpop.f32.mrb[0].mxu0
  %v1189 = vadd.f32 %v897, %v1188
  %v1190 = vpop.f32.mrb[0].mxu0
  %1191 = vdwg.mxu0
  %v1192 = vmax.f32 %v1054, 0.0
  %v1193 = vmax.f32 %v1059, 0.0
  %v1194 = vmax.f32 %v1064, 0.0
  %v1195 = vmax.f32 %v1069, 0.0
  %v1196 = vmax.f32 %v1074, 0.0
  %v1197 = vmax.f32 %v1079, 0.0
  %v1198 = vmax.f32 %v1084, 0.0
  %v1199 = vmax.f32 %v1089, 0.0
  %v1200 = vmax.f32 %v1094, 0.0
  %v1201 = vmax.f32 %v1099, 0.0
  %v1202 = vmax.f32 %v1104, 0.0
  %v1203 = vmax.f32 %v1109, 0.0
  %v1204 = vmax.f32 %v1114, 0.0
  %v1205 = vmax.f32 %v1119, 0.0
  %v1206 = vmax.f32 %v1124, 0.0
  %v1207 = vmax.f32 %v1129, 0.0
  %v1208 = vmax.f32 %v1134, 0.0
  %v1209 = vmax.f32 %v1139, 0.0
  %v1210 = vmax.f32 %v1144, 0.0
  %v1211 = vmax.f32 %v1149, 0.0
  %v1212 = vmax.f32 %v1154, 0.0
  %v1213 = vmax.f32 %v1159, 0.0
  %v1214 = vmax.f32 %v1164, 0.0
  %v1215 = vmax.f32 %v1169, 0.0
  %v1216 = vmax.f32 %v1174, 0.0
  %v1217 = vmax.f32 %v1179, 0.0
  %v1218 = vmax.f32 %v1184, 0.0
  %v1219 = vmax.f32 %v1189, 0.0
  %v1220 = vlaneseq
  %v1221 = vshrl.u32 %v1220, 7
  %v1222 = vsub.s32 0, %v1221
  %v1223 = vrot.slane %v34, %v1222
  %v1224 = vmul.f32 %v1192, %v1223
  %v1225 = vmul.f32 %v1193, %v1223
  %v1226 = vmul.f32 %v1194, %v1223
  %v1227 = vmul.f32 %v1195, %v1223
  %v1228 = vmul.f32 %v1196, %v1223
  %v1229 = vmul.f32 %v1197, %v1223
  %v1230 = vmul.f32 %v1198, %v1223
  %v1231 = vmul.f32 %v1199, %v1223
  %v1232 = vmul.f32 %v1200, %v1223
  %v1233 = vmul.f32 %v1201, %v1223
  %v1234 = vmul.f32 %v1202, %v1223
  %v1235 = vmul.f32 %v1203, %v1223
  %v1236 = vmul.f32 %v1204, %v1223
  %v1237 = vmul.f32 %v1205, %v1223
  %v1238 = vmul.f32 %v1206, %v1223
  %v1239 = vmul.f32 %v1207, %v1223
  %v1240 = vmul.f32 %v1208, %v1223
  %v1241 = vmul.f32 %v1209, %v1223
  %v1242 = vmul.f32 %v1210, %v1223
  %v1243 = vmul.f32 %v1211, %v1223
  %v1244 = vmul.f32 %v1212, %v1223
  %v1245 = vmul.f32 %v1213, %v1223
  %v1246 = vmul.f32 %v1214, %v1223
  %v1247 = vmul.f32 %v1215, %v1223
  %v1248 = vmul.f32 %v1216, %v1223
  %v1249 = vmul.f32 %v1217, %v1223
  %v1250 = vmul.f32 %v1218, %v1223
  %v1251 = vmul.f32 %v1219, %v1223
  %v1252 = vsel %vm898, %v1224, 0.0
  %1253 = vadd.xlane.f32.xlu0 %v1252
  %v1254 = vpop.xlane.xlu0 %1253
  %v1255 = vsel %vm898, %v1225, 0.0
  %1256 = vadd.xlane.f32.xlu0 %v1255
  %v1257 = vpop.xlane.xlu0 %1256
  %v1258 = vsel %vm898, %v1226, 0.0
  %1259 = vadd.xlane.f32.xlu0 %v1258
  %v1260 = vpop.xlane.xlu0 %1259
  %v1261 = vsel %vm898, %v1227, 0.0
  %1262 = vadd.xlane.f32.xlu0 %v1261
  %v1263 = vpop.xlane.xlu0 %1262
  %v1264 = vsel %vm898, %v1228, 0.0
  %1265 = vadd.xlane.f32.xlu0 %v1264
  %v1266 = vpop.xlane.xlu0 %1265
  %v1267 = vsel %vm898, %v1229, 0.0
  %1268 = vadd.xlane.f32.xlu0 %v1267
  %v1269 = vpop.xlane.xlu0 %1268
  %v1270 = vsel %vm898, %v1230, 0.0
  %1271 = vadd.xlane.f32.xlu0 %v1270
  %v1272 = vpop.xlane.xlu0 %1271
  %v1273 = vsel %vm898, %v1231, 0.0
  %1274 = vadd.xlane.f32.xlu0 %v1273
  %v1275 = vpop.xlane.xlu0 %1274
  %v1276 = vsel %vm898, %v1232, 0.0
  %1277 = vadd.xlane.f32.xlu0 %v1276
  %v1278 = vpop.xlane.xlu0 %1277
  %v1279 = vsel %vm898, %v1233, 0.0
  %1280 = vadd.xlane.f32.xlu0 %v1279
  %v1281 = vpop.xlane.xlu0 %1280
  %v1282 = vsel %vm898, %v1234, 0.0
  %1283 = vadd.xlane.f32.xlu0 %v1282
  %v1284 = vpop.xlane.xlu0 %1283
  %v1285 = vsel %vm898, %v1235, 0.0
  %1286 = vadd.xlane.f32.xlu0 %v1285
  %v1287 = vpop.xlane.xlu0 %1286
  %v1288 = vsel %vm898, %v1236, 0.0
  %1289 = vadd.xlane.f32.xlu0 %v1288
  %v1290 = vpop.xlane.xlu0 %1289
  %v1291 = vsel %vm898, %v1237, 0.0
  %1292 = vadd.xlane.f32.xlu0 %v1291
  %v1293 = vpop.xlane.xlu0 %1292
  %v1294 = vsel %vm898, %v1238, 0.0
  %1295 = vadd.xlane.f32.xlu0 %v1294
  %v1296 = vpop.xlane.xlu0 %1295
  %v1297 = vsel %vm898, %v1239, 0.0
  %1298 = vadd.xlane.f32.xlu0 %v1297
  %v1299 = vpop.xlane.xlu0 %1298
  %v1300 = vsel %vm898, %v1240, 0.0
  %1301 = vadd.xlane.f32.xlu0 %v1300
  %v1302 = vpop.xlane.xlu0 %1301
  %v1303 = vsel %vm898, %v1241, 0.0
  %1304 = vadd.xlane.f32.xlu0 %v1303
  %v1305 = vpop.xlane.xlu0 %1304
  %v1306 = vsel %vm898, %v1242, 0.0
  %1307 = vadd.xlane.f32.xlu0 %v1306
  %v1308 = vpop.xlane.xlu0 %1307
  %v1309 = vsel %vm898, %v1243, 0.0
  %1310 = vadd.xlane.f32.xlu0 %v1309
  %v1311 = vpop.xlane.xlu0 %1310
  %v1312 = vsel %vm898, %v1244, 0.0
  %1313 = vadd.xlane.f32.xlu0 %v1312
  %v1314 = vpop.xlane.xlu0 %1313
  %v1315 = vsel %vm898, %v1245, 0.0
  %1316 = vadd.xlane.f32.xlu0 %v1315
  %v1317 = vpop.xlane.xlu0 %1316
  %v1318 = vsel %vm898, %v1246, 0.0
  %1319 = vadd.xlane.f32.xlu0 %v1318
  %v1320 = vpop.xlane.xlu0 %1319
  %v1321 = vsel %vm898, %v1247, 0.0
  %1322 = vadd.xlane.f32.xlu0 %v1321
  %v1323 = vpop.xlane.xlu0 %1322
  %v1324 = vsel %vm898, %v1248, 0.0
  %1325 = vadd.xlane.f32.xlu0 %v1324
  %v1326 = vpop.xlane.xlu0 %1325
  %v1327 = vsel %vm898, %v1249, 0.0
  %1328 = vadd.xlane.f32.xlu0 %v1327
  %v1329 = vpop.xlane.xlu0 %1328
  %v1330 = vsel %vm898, %v1250, 0.0
  %1331 = vadd.xlane.f32.xlu0 %v1330
  %v1332 = vpop.xlane.xlu0 %1331
  %v1333 = vsel %vm898, %v1251, 0.0
  %1334 = vadd.xlane.f32.xlu0 %v1333
  %v1335 = vpop.xlane.xlu0 %1334
  %v1336 = vlaneseq
  %v1337 = vshrl.u32 %v1336, 7
  %v1338 = vsub.s32 0, %v1337
  %v1339 = vrot.slane %v35, %v1338
  %v1340 = vadd.f32 %v1254, %v1339
  %v1341 = vadd.f32 %v1257, %v1339
  %v1342 = vadd.f32 %v1260, %v1339
  %v1343 = vadd.f32 %v1263, %v1339
  %v1344 = vadd.f32 %v1266, %v1339
  %v1345 = vadd.f32 %v1269, %v1339
  %v1346 = vadd.f32 %v1272, %v1339
  %v1347 = vadd.f32 %v1275, %v1339
  %v1348 = vadd.f32 %v1278, %v1339
  %v1349 = vadd.f32 %v1281, %v1339
  %v1350 = vadd.f32 %v1284, %v1339
  %v1351 = vadd.f32 %v1287, %v1339
  %v1352 = vadd.f32 %v1290, %v1339
  %v1353 = vadd.f32 %v1293, %v1339
  %v1354 = vadd.f32 %v1296, %v1339
  %v1355 = vadd.f32 %v1299, %v1339
  %v1356 = vadd.f32 %v1302, %v1339
  %v1357 = vadd.f32 %v1305, %v1339
  %v1358 = vadd.f32 %v1308, %v1339
  %v1359 = vadd.f32 %v1311, %v1339
  %v1360 = vadd.f32 %v1314, %v1339
  %v1361 = vadd.f32 %v1317, %v1339
  %v1362 = vadd.f32 %v1320, %v1339
  %v1363 = vadd.f32 %v1323, %v1339
  %v1364 = vadd.f32 %v1326, %v1339
  %v1365 = vadd.f32 %v1329, %v1339
  %v1366 = vadd.f32 %v1332, %v1339
  %v1367 = vadd.f32 %v1335, %v1339
  %v1368 = vld [vmem:[%s2] sm:$0xff]
  %v1369 = vld [vmem:[%s2 + $0x8] sm:$0xff]
  %v1370 = vld [vmem:[%s2 + $0x10] sm:$0xff]
  %v1371 = vld [vmem:[%s2 + $0x18] sm:$0xff]
  %v1372 = vld [vmem:[%s2 + $0x20] sm:$0xff]
  %v1373 = vld [vmem:[%s2 + $0x28] sm:$0xff]
  %v1374 = vld [vmem:[%s2 + $0x30] sm:$0xff]
  %v1375 = vld [vmem:[%s2 + $0x38] sm:$0xff]
  %v1376 = vld [vmem:[%s2 + $0x40] sm:$0xff]
  %v1377 = vld [vmem:[%s2 + $0x48] sm:$0xff]
  %v1378 = vld [vmem:[%s2 + $0x50] sm:$0xff]
  %v1379 = vld [vmem:[%s2 + $0x58] sm:$0xff]
  %v1380 = vld [vmem:[%s2 + $0x60] sm:$0xff]
  %v1381 = vld [vmem:[%s2 + $0x68] sm:$0xff]
  %v1382 = vld [vmem:[%s2 + $0x70] sm:$0xff]
  %v1383 = vld [vmem:[%s2 + $0x78] sm:$0xff]
  %v1384 = vld [vmem:[%s2 + $0x80] sm:$0xff]
  %v1385 = vld [vmem:[%s2 + $0x88] sm:$0xff]
  %v1386 = vld [vmem:[%s2 + $0x90] sm:$0xff]
  %v1387 = vld [vmem:[%s2 + $0x98] sm:$0xff]
  %v1388 = vld [vmem:[%s2 + $0xa0] sm:$0xff]
  %v1389 = vld [vmem:[%s2 + $0xa8] sm:$0xff]
  %v1390 = vld [vmem:[%s2 + $0xb0] sm:$0xff]
  %v1391 = vld [vmem:[%s2 + $0xb8] sm:$0xff]
  %v1392 = vld [vmem:[%s2 + $0xc0] sm:$0xff]
  %v1393 = vld [vmem:[%s2 + $0xc8] sm:$0xff]
  %v1394 = vld [vmem:[%s2 + $0xd0] sm:$0xff]
  %v1395 = vld [vmem:[%s2 + $0xd8] sm:$0xff]
  %1397 = vset.pattern.permute.xlu0 0
  %1398 = vperm.xlu0 %1397, %v1340
  %v1399 = vpop.permute.xlu0 %1398
  %1402 = vset.pattern.permute.xlu0 0
  %1403 = vperm.xlu0 %1402, %v1341
  %v1404 = vpop.permute.xlu0 %1403
  %1407 = vset.pattern.permute.xlu0 0
  %1408 = vperm.xlu0 %1407, %v1342
  %v1409 = vpop.permute.xlu0 %1408
  %1412 = vset.pattern.permute.xlu0 0
  %1413 = vperm.xlu0 %1412, %v1343
  %v1414 = vpop.permute.xlu0 %1413
  %1417 = vset.pattern.permute.xlu0 0
  %1418 = vperm.xlu0 %1417, %v1344
  %v1419 = vpop.permute.xlu0 %1418
  %1422 = vset.pattern.permute.xlu0 0
  %1423 = vperm.xlu0 %1422, %v1345
  %v1424 = vpop.permute.xlu0 %1423
  %1427 = vset.pattern.permute.xlu0 0
  %1428 = vperm.xlu0 %1427, %v1346
  %v1429 = vpop.permute.xlu0 %1428
  %1432 = vset.pattern.permute.xlu0 0
  %1433 = vperm.xlu0 %1432, %v1347
  %v1434 = vpop.permute.xlu0 %1433
  %1437 = vset.pattern.permute.xlu0 0
  %1438 = vperm.xlu0 %1437, %v1348
  %v1439 = vpop.permute.xlu0 %1438
  %1442 = vset.pattern.permute.xlu0 0
  %1443 = vperm.xlu0 %1442, %v1349
  %v1444 = vpop.permute.xlu0 %1443
  %1447 = vset.pattern.permute.xlu0 0
  %1448 = vperm.xlu0 %1447, %v1350
  %v1449 = vpop.permute.xlu0 %1448
  %1452 = vset.pattern.permute.xlu0 0
  %1453 = vperm.xlu0 %1452, %v1351
  %v1454 = vpop.permute.xlu0 %1453
  %1457 = vset.pattern.permute.xlu0 0
  %1458 = vperm.xlu0 %1457, %v1352
  %v1459 = vpop.permute.xlu0 %1458
  %1462 = vset.pattern.permute.xlu0 0
  %1463 = vperm.xlu0 %1462, %v1353
  %v1464 = vpop.permute.xlu0 %1463
  %1467 = vset.pattern.permute.xlu0 0
  %1468 = vperm.xlu0 %1467, %v1354
  %v1469 = vpop.permute.xlu0 %1468
  %1472 = vset.pattern.permute.xlu0 0
  %1473 = vperm.xlu0 %1472, %v1355
  %v1474 = vpop.permute.xlu0 %1473
  %1477 = vset.pattern.permute.xlu0 0
  %1478 = vperm.xlu0 %1477, %v1356
  %v1479 = vpop.permute.xlu0 %1478
  %1482 = vset.pattern.permute.xlu0 0
  %1483 = vperm.xlu0 %1482, %v1357
  %v1484 = vpop.permute.xlu0 %1483
  %1487 = vset.pattern.permute.xlu0 0
  %1488 = vperm.xlu0 %1487, %v1358
  %v1489 = vpop.permute.xlu0 %1488
  %1492 = vset.pattern.permute.xlu0 0
  %1493 = vperm.xlu0 %1492, %v1359
  %v1494 = vpop.permute.xlu0 %1493
  %1497 = vset.pattern.permute.xlu0 0
  %1498 = vperm.xlu0 %1497, %v1360
  %v1499 = vpop.permute.xlu0 %1498
  %1502 = vset.pattern.permute.xlu0 0
  %1503 = vperm.xlu0 %1502, %v1361
  %v1504 = vpop.permute.xlu0 %1503
  %1507 = vset.pattern.permute.xlu0 0
  %1508 = vperm.xlu0 %1507, %v1362
  %v1509 = vpop.permute.xlu0 %1508
  %1512 = vset.pattern.permute.xlu0 0
  %1513 = vperm.xlu0 %1512, %v1363
  %v1514 = vpop.permute.xlu0 %1513
  %1517 = vset.pattern.permute.xlu0 0
  %1518 = vperm.xlu0 %1517, %v1364
  %v1519 = vpop.permute.xlu0 %1518
  %1522 = vset.pattern.permute.xlu0 0
  %1523 = vperm.xlu0 %1522, %v1365
  %v1524 = vpop.permute.xlu0 %1523
  %1527 = vset.pattern.permute.xlu0 0
  %1528 = vperm.xlu0 %1527, %v1366
  %v1529 = vpop.permute.xlu0 %1528
  %1532 = vset.pattern.permute.xlu0 0
  %1533 = vperm.xlu0 %1532, %v1367
  %v1534 = vpop.permute.xlu0 %1533
  %v1536 = vmul.f32 %v1399, %v1368
  %v1537 = vmul.f32 %v1404, %v1369
  %v1538 = vmul.f32 %v1409, %v1370
  %v1539 = vmul.f32 %v1414, %v1371
  %v1540 = vmul.f32 %v1419, %v1372
  %v1541 = vmul.f32 %v1424, %v1373
  %v1542 = vmul.f32 %v1429, %v1374
  %v1543 = vmul.f32 %v1434, %v1375
  %v1544 = vmul.f32 %v1439, %v1376
  %v1545 = vmul.f32 %v1444, %v1377
  %v1546 = vmul.f32 %v1449, %v1378
  %v1547 = vmul.f32 %v1454, %v1379
  %v1548 = vmul.f32 %v1459, %v1380
  %v1549 = vmul.f32 %v1464, %v1381
  %v1550 = vmul.f32 %v1469, %v1382
  %v1551 = vmul.f32 %v1474, %v1383
  %v1552 = vmul.f32 %v1479, %v1384
  %v1553 = vmul.f32 %v1484, %v1385
  %v1554 = vmul.f32 %v1489, %v1386
  %v1555 = vmul.f32 %v1494, %v1387
  %v1556 = vmul.f32 %v1499, %v1388
  %v1557 = vmul.f32 %v1504, %v1389
  %v1558 = vmul.f32 %v1509, %v1390
  %v1559 = vmul.f32 %v1514, %v1391
  %v1560 = vmul.f32 %v1519, %v1392
  %v1561 = vmul.f32 %v1524, %v1393
  %v1562 = vmul.f32 %v1529, %v1394
  %v1563 = vmul.f32 %v1534, %v1395
  %v1565 = vsel %vm520, 1.0, 0
  %1567 = vmatprep.subr.mxu0 0.0
  %1568 = vmatpush1.msra.mxu0 %v1536
  %1569 = vmatprep.subr.mxu0 0.0
  %1570 = vmatpush1.msra.mxu0 %v1537
  %1571 = vmatprep.subr.mxu0 0.0
  %1572 = vmatpush1.msra.mxu0 %v1538
  %1573 = vmatprep.subr.mxu0 0.0
  %1574 = vmatpush1.msra.mxu0 %v1539
  %1575 = vmatprep.subr.mxu0 0.0
  %1576 = vmatpush1.msra.mxu0 %v1540
  %1577 = vmatprep.subr.mxu0 0.0
  %1578 = vmatpush1.msra.mxu0 %v1541
  %1579 = vmatprep.subr.mxu0 0.0
  %1580 = vmatpush1.msra.mxu0 %v1542
  %1581 = vmatprep.subr.mxu0 0.0
  %1582 = vmatpush1.msra.mxu0 %v1543
  %1583 = vmatprep.subr.mxu0 0.0
  %1584 = vmatpush1.msra.mxu0 %v1544
  %1585 = vmatprep.subr.mxu0 0.0
  %1586 = vmatpush1.msra.mxu0 %v1545
  %1587 = vmatprep.subr.mxu0 0.0
  %1588 = vmatpush1.msra.mxu0 %v1546
  %1589 = vmatprep.subr.mxu0 0.0
  %1590 = vmatpush1.msra.mxu0 %v1547
  %1591 = vmatprep.subr.mxu0 0.0
  %1592 = vmatpush1.msra.mxu0 %v1548
  %1593 = vmatprep.subr.mxu0 0.0
  %1594 = vmatpush1.msra.mxu0 %v1549
  %1595 = vmatprep.subr.mxu0 0.0
  %1596 = vmatpush1.msra.mxu0 %v1550
  %1597 = vmatprep.subr.mxu0 0.0
  %1598 = vmatpush1.msra.mxu0 %v1551
  %1599 = vmatprep.subr.mxu0 0.0
  %1600 = vmatpush1.msra.mxu0 %v1552
  %1601 = vmatprep.subr.mxu0 0.0
  %1602 = vmatpush1.msra.mxu0 %v1553
  %1603 = vmatprep.subr.mxu0 0.0
  %1604 = vmatpush1.msra.mxu0 %v1554
  %1605 = vmatprep.subr.mxu0 0.0
  %1606 = vmatpush1.msra.mxu0 %v1555
  %1607 = vmatprep.subr.mxu0 0.0
  %1608 = vmatpush1.msra.mxu0 %v1556
  %1609 = vmatprep.subr.mxu0 0.0
  %1610 = vmatpush1.msra.mxu0 %v1557
  %1611 = vmatprep.subr.mxu0 0.0
  %1612 = vmatpush1.msra.mxu0 %v1558
  %1613 = vmatprep.subr.mxu0 0.0
  %1614 = vmatpush1.msra.mxu0 %v1559
  %1615 = vmatprep.subr.mxu0 0.0
  %1616 = vmatpush1.msra.mxu0 %v1560
  %1617 = vmatprep.subr.mxu0 0.0
  %1618 = vmatpush1.msra.mxu0 %v1561
  %1619 = vmatprep.subr.mxu0 0.0
  %1620 = vmatpush1.msra.mxu0 %v1562
  %1621 = vmatprep.subr.mxu0 0.0
  %1622 = vmatpush1.msra.mxu0 %v1563
  %1623 = vmatprep.subr.mxu0 0.0
  %1624 = vmatpush1.msra.mxu0 0.0
  %1625 = vmatprep.subr.mxu0 0.0
  %1626 = vmatpush1.msra.mxu0 0.0
  %1627 = vmatprep.subr.mxu0 0.0
  %1628 = vmatpush1.msra.mxu0 0.0
  %1629 = vmatprep.subr.mxu0 0.0
  %1630 = vmatpush1.msra.mxu0 0.0
  %1631 = vmatprep.mubr.f32.mxu0 %v1565
  %1632 = vmatmul.mubr.f32.gmra.mrb[0].mxu0 1.0
  %v1633 = vpop.f32.mrb[0].mxu0
  %v1634 = vadd.f32 0.0, %v1633
  %v1635 = vpop.f32.mrb[0].mxu0
  %1636 = vdwg.mxu0
  %vm1637 = vcmask 253952
  %1638 = vst.msk [vmem:[%s6] sm:$0x1] %vm1637, %v1634
  // Predicated region
  $region26: #{frap_forward_pallas.1} parent=0 // pred_check
    _
  $region27: #{frap_forward_pallas.1} parent=0 // pred_check_branch
    %1640 = sbr.rel (0) target = $region29
  $region28: #{frap_forward_pallas.1} parent=0 // pred_region
    _
  $region29: #{frap_forward_pallas.1} parent=0 // pred_fallthru
    _
  // Predicated region
  $region30: #{frap_forward_pallas.1} parent=0 // pred_check
    _
  $region31: #{frap_forward_pallas.1} parent=0 // pred_check_branch
    %1642 = sbr.rel (0) target = $region33
  $region32: #{frap_forward_pallas.1} parent=0 // pred_region
    _
  $region33: #{frap_forward_pallas.1} parent=0 // pred_fallthru
    _

</llo_original>
